<compile_context>
chip_gen: v7x
topology: tpu7x:2x2x1
jax: 0.10.0
libtpu: 0.0.40
codegen_flags: <defaults>
</compile_context>

<pallas_src>
import functools
import math

import jax
import jax.numpy as jnp
from jax import lax
from jax.experimental import pallas as pl
from jax.experimental.pallas import tpu as pltpu

_F32 = jnp.float32
_BF16 = jnp.bfloat16


# ----------------------------------------------------------------------------
# In-kernel math helpers (all f32 unless noted)
# ----------------------------------------------------------------------------
def _fast_recip(d):
    # EUP approximate reciprocal + one Newton step (full f32 accuracy).
    r = pl.reciprocal(d, approx=True)
    return r * (2.0 - d * r)


def _layer_norm(v, g, b, eps):
    mu = jnp.mean(v, axis=-1, keepdims=True)
    cent = v - mu
    var = jnp.mean(cent * cent, axis=-1, keepdims=True)
    return cent * lax.rsqrt(var + eps) * g + b


def _fast_softmax(s):
    m = jnp.max(s, axis=-1, keepdims=True)
    e = jnp.exp(s - m)
    d = jnp.sum(e, axis=-1, keepdims=True)
    return e * _fast_recip(d)


def _erf(z):
    # Abramowitz & Stegun 7.1.26 (|err| < 1.5e-7); reciprocal on the EUP.
    p = 0.3275911
    a1, a2, a3, a4, a5 = (0.254829592, -0.284496736, 1.421413741,
                          -1.453152027, 1.061405429)
    az = jnp.abs(z)
    t = _fast_recip(1.0 + p * az)
    poly = ((((a5 * t + a4) * t + a3) * t + a2) * t + a1) * t
    y = 1.0 - poly * jnp.exp(-az * az)
    return jnp.where(z < 0, -y, y)


def _gelu_exact(z):
    # nn.GELU() default = exact erf-based GELU.
    return 0.5 * z * (1.0 + _erf(z * (1.0 / math.sqrt(2.0))))


def _mm(a_f32, w_bf16, bias_f32):
    # bf16 MXU inputs, f32 accumulation, f32 bias.
    return jnp.dot(a_f32.astype(_BF16), w_bf16,
                   preferred_element_type=_F32) + bias_f32


# ----------------------------------------------------------------------------
# Kernel: grid = (batch_blocks, layers); hidden state carried in VMEM scratch.
# ----------------------------------------------------------------------------
def transformer_kernel(
    x_ref,                      # (Bblk, S, C) f32   input features
    pos_ref,                    # (S, E)       f32   positional embeddings
    wt0_ref, bt0_ref,           # (C, E) bf16, (1, E) f32   BaseEncoder.layer_0
    wt1_ref, bt1_ref,           # (E, E) bf16, (1, E) f32   BaseEncoder.out
    emb_g_ref, emb_b_ref,       # (1, E) f32                Embeddings.layer_norm
    ln1_g_ref, ln1_b_ref,       # (1, 1, E) f32             layer_norm_1 (this layer)
    wqkv_ref, bqkv_ref,         # (1, E, 3E) bf16, (1, 1, 3E) f32  fused Q|K|V (Q pre-scaled)
    wo_ref, bo_ref,             # (1, E, E) bf16, (1, 1, E) f32    MHA output_layer
    ln2_g_ref, ln2_b_ref,       # (1, 1, E) f32             layer_norm_2
    w1_ref, b1_ref,             # (1, E, I) bf16, (1, 1, I) f32    FeedForward.linear_1
    w2_ref, b2_ref,             # (1, I, E) bf16, (1, 1, E) f32    FeedForward.linear_2
    wc_ref, bc_ref,             # (E, NLpad) bf16, (1, NLpad) f32  classifier (padded)
    o_ref,                      # (1, Bblk, NLpad) f32      logits
    h_ref,                      # scratch: (Bblk, S, E) f32 hidden-state carry
    *,
    num_heads,
):
    l = pl.program_id(1)
    num_layers = pl.num_programs(1)

    bblk, S, C = x_ref.shape          # S should be a multiple of 8 so the
    E = pos_ref.shape[-1]             # (bblk,S,E)<->(rows,E) reshapes are views
    hd = E // num_heads
    rows = bblk * S

    # ------------------------- Embeddings (first layer step only) ----------
    @pl.when(l == 0)
    def _embed():
        x2d = x_ref[...].astype(_F32).reshape(rows, C)
        t = _mm(x2d, wt0_ref[...], bt0_ref[...])        # BaseEncoder.layer_0
        t = _mm(t, wt1_ref[...], bt1_ref[...])          # BaseEncoder.out
        t = t.reshape(bblk, S, E) + pos_ref[...][None]  # + positional embeddings
        h_ref[...] = _layer_norm(t, emb_g_ref[...], emb_b_ref[...], 1e-12)
        # Embeddings.dropout: identity at inference.

    h = h_ref[...]

    # ------------------------- Encoder layer l ------------------------------
    # Multi-head self-attention; fused QKV projection = one big MXU matmul.
    hs = _layer_norm(h, ln1_g_ref[0], ln1_b_ref[0], 1e-5)
    qkv = _mm(hs.reshape(rows, E), wqkv_ref[0], bqkv_ref[0])     # (rows, 3E) f32
    qkv = qkv.reshape(bblk, S, 3 * E).astype(_BF16)              # bf16 for attn MXU

    ctx = []
    for hh in range(num_heads):
        q = qkv[:, :, hh * hd:(hh + 1) * hd]                     # pre-scaled by 1/sqrt(hd)
        k = qkv[:, :, E + hh * hd:E + (hh + 1) * hd]
        v = qkv[:, :, 2 * E + hh * hd:2 * E + (hh + 1) * hd]
        # Q @ K^T contracting last axes directly (no materialized transpose).
        s = lax.dot_general(q, k, (((2,), (2,)), ((0,), (0,))),
                            preferred_element_type=_F32)          # (bblk, S, S)
        p = _fast_softmax(s)                                      # f32
        ctx.append(lax.dot_general(p.astype(_BF16), v,
                                   (((2,), (1,)), ((0,), (0,))),
                                   preferred_element_type=_F32))  # (bblk, S, hd)
    ctx = jnp.concatenate(ctx, axis=-1)                           # (bblk, S, E) f32
    attn = _mm(ctx.reshape(rows, E), wo_ref[0], bo_ref[0])
    h = h + attn.reshape(bblk, S, E)

    # Feed-forward.
    hs = _layer_norm(h, ln2_g_ref[0], ln2_b_ref[0], 1e-5)
    z = _mm(hs.reshape(rows, E), w1_ref[0], b1_ref[0])
    z = _gelu_exact(z)
    z = _mm(z, w2_ref[0], b2_ref[0])
    h = h + z.reshape(bblk, S, E)
    # FeedForward.dropout: identity at inference.

    h_ref[...] = h

    # ------------------------- CLS pooling + classifier (last layer) -------
    @pl.when(l == num_layers - 1)
    def _classify():
        cls = h[:, 0, :]                                          # (bblk, E)
        logits = _mm(cls, wc_ref[...], bc_ref[...])               # (bblk, NLpad)
        o_ref[0] = logits.astype(o_ref.dtype)


# ----------------------------------------------------------------------------
# Wrapper
# ----------------------------------------------------------------------------
def _choose_batch_block(B, S, target_rows=512):
    # Biggest divisor of B keeping ~target_rows rows per grid step (fills the
    # 256-wide MXUs on v6e/v7x and amortizes ~0.35us/step overhead), but keep
    # >= 2 parallel grid steps when possible so v7x's two TensorCores are busy.
    divisors = [d for d in range(1, B + 1) if B % d == 0]
    bblk = max([d for d in divisors if d * S <= target_rows] or [1])
    if B // bblk < 2:
        two_step = [d for d in divisors if B // d >= 2]
        if two_step:
            bblk = max(two_step)
    return bblk


def _rep(nd):
    def idx(b, l):
        return (0,) * nd
    return idx


def _per_layer(nd):
    def idx(b, l):
        return (l,) + (0,) * (nd - 1)
    return idx


def transformer_forward(x, params, *, num_heads):
    B, S, C = x.shape
    E = params["pos"].shape[-1]
    L = params["wqkv"].shape[0]
    inter = params["w1"].shape[-1]
    NL = params["wc"].shape[-1]
    NLpad = ((NL + 127) // 128) * 128      # lane-dense classifier output

    bblk = _choose_batch_block(B, S)
    nb = B // bblk

    # Fold the 1/sqrt(head_dim) attention scale into the Q weights/bias (f32),
    # then convert matmul weights to bf16 (halves DMA bytes + VMEM footprint).
    scale = 1.0 / math.sqrt(float(E // num_heads))
    wqkv = params["wqkv"].at[:, :, :E].multiply(scale)
    bqkv = params["bqkv"].at[:, :, :E].multiply(scale)

    wc = jnp.zeros((E, NLpad), _F32).at[:, :NL].set(params["wc"])
    bc = jnp.zeros((1, NLpad), _F32).at[:, :NL].set(params["bc"])

    bf = lambda w: w.astype(_BF16)
    pos = params["pos"][:S]                # positions arange(S)

    # (array, block_shape, index_map) — per-layer weights are streamed along
    # the l grid axis (double-buffered: next layer's DMA overlaps compute).
    inputs = [
        (x,                  (bblk, S, C),     lambda b, l: (b, 0, 0)),
        (pos,                (S, E),           _rep(2)),
        (bf(params["wt0"]),  (C, E),           _rep(2)),
        (params["bt0"],      (1, E),           _rep(2)),
        (bf(params["wt1"]),  (E, E),           _rep(2)),
        (params["bt1"],      (1, E),           _rep(2)),
        (params["emb_g"],    (1, E),           _rep(2)),
        (params["emb_b"],    (1, E),           _rep(2)),
        (params["ln1_g"],    (1, 1, E),        _per_layer(3)),
        (params["ln1_b"],    (1, 1, E),        _per_layer(3)),
        (bf(wqkv),           (1, E, 3 * E),    _per_layer(3)),
        (bqkv,               (1, 1, 3 * E),    _per_layer(3)),
        (bf(params["wo"]),   (1, E, E),        _per_layer(3)),
        (params["bo"],       (1, 1, E),        _per_layer(3)),
        (params["ln2_g"],    (1, 1, E),        _per_layer(3)),
        (params["ln2_b"],    (1, 1, E),        _per_layer(3)),
        (bf(params["w1"]),   (1, E, inter),    _per_layer(3)),
        (params["b1"],       (1, 1, inter),    _per_layer(3)),
        (bf(params["w2"]),   (1, inter, E),    _per_layer(3)),
        (params["b2"],       (1, 1, E),        _per_layer(3)),
        (bf(wc),             (E, NLpad),       _rep(2)),
        (bc,                 (1, NLpad),       _rep(2)),
    ]

    in_specs = [pl.BlockSpec(bs, im) for (_, bs, im) in inputs]
    args = [a for (a, _, _) in inputs]

    out_spec = pl.BlockSpec((1, bblk, NLpad), lambda b, l: (b, 0, 0))
    out_shape = jax.ShapeDtypeStruct((nb, bblk, NLpad), x.dtype)
    scratch = [pltpu.VMEM((bblk, S, E), _F32)]          # hidden-state carry

    # VMEM budget: 2x every pipelined block (double-buffer) + carry scratch,
    # with 2x headroom; never below the 32 MiB default, capped with headroom
    # for v7x's 64 MiB physical VMEM in mind (toy config stays at 32 MiB).
    est = sum(2 * math.prod(bs) * a.dtype.itemsize for (a, bs, _) in inputs)
    est += 2 * bblk * NLpad * x.dtype.itemsize
    est += bblk * S * E * 4
    vmem_limit = int(min(100 * 2**20, max(32 * 2**20, 2 * est)))

    kernel = functools.partial(transformer_kernel, num_heads=num_heads)

    out = pl.pallas_call(
        kernel,
        out_shape=out_shape,
        grid_spec=pltpu.PrefetchScalarGridSpec(
            num_scalar_prefetch=0,
            grid=(nb, L),
            in_specs=in_specs,
            out_specs=out_spec,
            scratch_shapes=scratch),
        compiler_params=pltpu.CompilerParams(
            dimension_semantics=("parallel", "arbitrary"),
            vmem_limit_bytes=vmem_limit),
    )(*args)
    return out.reshape(B, NLpad)[:, :NL]


# ----------------------------------------------------------------------------
# Parameters + pure-JAX f32 reference (PyTorch-faithful)
# ----------------------------------------------------------------------------
def init_params(key, *, C, E, I, L, NL, P):
    keys = iter(jax.random.split(key, 64))

    def linear(fan_in, fan_out):
        bound = 1.0 / math.sqrt(fan_in)
        w = jax.random.uniform(next(keys), (fan_in, fan_out), _F32, -bound, bound)
        b = jax.random.uniform(next(keys), (fan_out,), _F32, -bound, bound)
        return w, b

    def ln_params(n):
        g = 1.0 + 0.1 * jax.random.normal(next(keys), (n,), _F32)
        b = 0.1 * jax.random.normal(next(keys), (n,), _F32)
        return g, b

    wt0, bt0 = linear(C, E)
    wt1, bt1 = linear(E, E)
    emb_g, emb_b = ln_params(E)
    pos = 0.02 * jax.random.normal(next(keys), (P, E), _F32)

    ln1_g, ln1_b, wqkv, bqkv, wo, bo = [], [], [], [], [], []
    ln2_g, ln2_b, w1, b1, w2, b2 = [], [], [], [], [], []
    for _ in range(L):
        g, be = ln_params(E); ln1_g.append(g); ln1_b.append(be)
        # Per-head q/k/v Linears (E -> head_dim) fused: cols [0:E)=Q, [E:2E)=K,
        # [2E:3E)=V (heads concatenated within each third).
        wq, bq = linear(E, E)
        wk, bk = linear(E, E)
        wv, bv = linear(E, E)
        wqkv.append(jnp.concatenate([wq, wk, wv], axis=1))
        bqkv.append(jnp.concatenate([bq, bk, bv], axis=0))
        w, be = linear(E, E); wo.append(w); bo.append(be)
        g, be = ln_params(E); ln2_g.append(g); ln2_b.append(be)
        w, be = linear(E, I); w1.append(w); b1.append(be)
        w, be = linear(I, E); w2.append(w); b2.append(be)

    wc, bc = linear(E, NL)

    stack_b = lambda lst: jnp.stack(lst)[:, None, :]   # (L, 1, N)
    stack_w = lambda lst: jnp.stack(lst)               # (L, in, out)

    return dict(
        wt0=wt0, bt0=bt0.reshape(1, E),
        wt1=wt1, bt1=bt1.reshape(1, E),
        emb_g=emb_g.reshape(1, E), emb_b=emb_b.reshape(1, E),
        pos=pos,
        ln1_g=stack_b(ln1_g), ln1_b=stack_b(ln1_b),
        wqkv=stack_w(wqkv), bqkv=stack_b(bqkv),
        wo=stack_w(wo), bo=stack_b(bo),
        ln2_g=stack_b(ln2_g), ln2_b=stack_b(ln2_b),
        w1=stack_w(w1), b1=stack_b(b1),
        w2=stack_w(w2), b2=stack_b(b2),
        wc=wc, bc=bc.reshape(1, NL),
    )


def reference_forward(x, params, *, num_heads):
    B, S, C = x.shape
    E = params["pos"].shape[-1]
    L = params["wqkv"].shape[0]
    hd = E // num_heads

    def ln(v, g, b, eps):
        mu = jnp.mean(v, axis=-1, keepdims=True)
        var = jnp.mean((v - mu) ** 2, axis=-1, keepdims=True)
        return (v - mu) / jnp.sqrt(var + eps) * g + b

    h = x @ params["wt0"] + params["bt0"]
    h = h @ params["wt1"] + params["bt1"]
    h = h + params["pos"][:S][None]
    h = ln(h, params["emb_g"], params["emb_b"], 1e-12)

    for l in range(L):
        hs = ln(h, params["ln1_g"][l], params["ln1_b"][l], 1e-5)
        qkv = hs @ params["wqkv"][l] + params["bqkv"][l]
        q, k, v = qkv[..., :E], qkv[..., E:2 * E], qkv[..., 2 * E:]
        heads = []
        for hh in range(num_heads):
            qh = q[..., hh * hd:(hh + 1) * hd]
            kh = k[..., hh * hd:(hh + 1) * hd]
            vh = v[..., hh * hd:(hh + 1) * hd]
            sc = jnp.einsum("bqd,bkd->bqk", qh, kh) / math.sqrt(hd)
            w = jax.nn.softmax(sc, axis=-1)
            heads.append(jnp.einsum("bqk,bkd->bqd", w, vh))
        ctx = jnp.concatenate(heads, axis=-1)
        h = h + (ctx @ params["wo"][l] + params["bo"][l])

        hs = ln(h, params["ln2_g"][l], params["ln2_b"][l], 1e-5)
        z = hs @ params["w1"][l] + params["b1"][l]
        z = jax.nn.gelu(z, approximate=False)
        z = z @ params["w2"][l] + params["b2"][l]
        h = h + z

    cls = h[:, 0, :]
    return cls @ params["wc"] + params["bc"]


# ----------------------------------------------------------------------------
# Main
# ----------------------------------------------------------------------------
if __name__ == "__main__":
    # Small config consistent with the module's forward:
    # input_ids: (batch, seq, num_channels)
    B, S, C = 2, 8, 4
    E, NH, I, L, NL, P = 32, 4, 64, 2, 3, 16   # embed=hidden=32, 4 heads, 2 layers

    key = jax.random.PRNGKey(0)
    kx, kp = jax.random.split(key)
    x = jax.random.normal(kx, (B, S, C), dtype=jnp.float32)
    params = init_params(kp, C=C, E=E, I=I, L=L, NL=NL, P=P)

    out = transformer_forward(x, params, num_heads=NH)
    out = jax.block_until_ready(out)

    with jax.default_matmul_precision("highest"):
        ref = reference_forward(x, params, num_heads=NH)
    ref = jax.block_until_ready(ref)

    assert out.shape == (B, NL), f"bad output shape {out.shape}"
    # Tolerance accounts for bf16 MXU inputs (f32 accumulation, f32 residual
    # stream) versus the all-f32 reference; observed error is well inside it.
    max_diff = float(jnp.max(jnp.abs(out - ref)))
    assert jnp.allclose(out, ref, atol=5e-2, rtol=5e-2), (
        f"mismatch vs reference, max abs diff = {max_diff}")

    print("KERNEL_OK")
</pallas_src>

<mosaic_0001>
module attributes {stable_mosaic.version = 11 : i64} {
  func.func @transformer_kernel(%arg0: i32, %arg1: i32, %arg2: memref<1x8x4xf32, #tpu.memory_space<vmem>>, %arg3: memref<8x32xf32, #tpu.memory_space<vmem>>, %arg4: memref<4x32xbf16, #tpu.memory_space<vmem>>, %arg5: memref<1x32xf32, #tpu.memory_space<vmem>>, %arg6: memref<32x32xbf16, #tpu.memory_space<vmem>>, %arg7: memref<1x32xf32, #tpu.memory_space<vmem>>, %arg8: memref<1x32xf32, #tpu.memory_space<vmem>>, %arg9: memref<1x32xf32, #tpu.memory_space<vmem>>, %arg10: memref<1x1x32xf32, #tpu.memory_space<vmem>>, %arg11: memref<1x1x32xf32, #tpu.memory_space<vmem>>, %arg12: memref<1x32x96xbf16, #tpu.memory_space<vmem>>, %arg13: memref<1x1x96xf32, #tpu.memory_space<vmem>>, %arg14: memref<1x32x32xbf16, #tpu.memory_space<vmem>>, %arg15: memref<1x1x32xf32, #tpu.memory_space<vmem>>, %arg16: memref<1x1x32xf32, #tpu.memory_space<vmem>>, %arg17: memref<1x1x32xf32, #tpu.memory_space<vmem>>, %arg18: memref<1x32x64xbf16, #tpu.memory_space<vmem>>, %arg19: memref<1x1x64xf32, #tpu.memory_space<vmem>>, %arg20: memref<1x64x32xbf16, #tpu.memory_space<vmem>>, %arg21: memref<1x1x32xf32, #tpu.memory_space<vmem>>, %arg22: memref<32x128xbf16, #tpu.memory_space<vmem>>, %arg23: memref<1x128xf32, #tpu.memory_space<vmem>>, %arg24: memref<1x1x128xf32, #tpu.memory_space<vmem>>, %arg25: memref<1x8x32xf32, #tpu.memory_space<vmem>>) attributes {dimension_semantics = [#tpu.dimension_semantics<parallel>, #tpu.dimension_semantics<arbitrary>], iteration_bounds = array<i64: 2, 2>, scalar_prefetch = 0 : i64, scratch_operands = 1 : i64, tpu.core_type = #tpu.core_type<tc>, window_params = [{transform_indices = @transform_0, window_bounds = array<i64: 1, 8, 4>}, {pipeline_mode = #tpu.pipeline_mode<synchronous>, transform_indices = @transform_1, window_bounds = array<i64: 8, 32>}, {pipeline_mode = #tpu.pipeline_mode<synchronous>, transform_indices = @transform_2, window_bounds = array<i64: 4, 32>}, {pipeline_mode = #tpu.pipeline_mode<synchronous>, transform_indices = @transform_3, window_bounds = array<i64: 1, 32>}, {pipeline_mode = #tpu.pipeline_mode<synchronous>, transform_indices = @transform_4, window_bounds = array<i64: 32, 32>}, {pipeline_mode = #tpu.pipeline_mode<synchronous>, transform_indices = @transform_5, window_bounds = array<i64: 1, 32>}, {pipeline_mode = #tpu.pipeline_mode<synchronous>, transform_indices = @transform_6, window_bounds = array<i64: 1, 32>}, {pipeline_mode = #tpu.pipeline_mode<synchronous>, transform_indices = @transform_7, window_bounds = array<i64: 1, 32>}, {transform_indices = @transform_8, window_bounds = array<i64: 1, 1, 32>}, {transform_indices = @transform_9, window_bounds = array<i64: 1, 1, 32>}, {transform_indices = @transform_10, window_bounds = array<i64: 1, 32, 96>}, {transform_indices = @transform_11, window_bounds = array<i64: 1, 1, 96>}, {transform_indices = @transform_12, window_bounds = array<i64: 1, 32, 32>}, {transform_indices = @transform_13, window_bounds = array<i64: 1, 1, 32>}, {transform_indices = @transform_14, window_bounds = array<i64: 1, 1, 32>}, {transform_indices = @transform_15, window_bounds = array<i64: 1, 1, 32>}, {transform_indices = @transform_16, window_bounds = array<i64: 1, 32, 64>}, {transform_indices = @transform_17, window_bounds = array<i64: 1, 1, 64>}, {transform_indices = @transform_18, window_bounds = array<i64: 1, 64, 32>}, {transform_indices = @transform_19, window_bounds = array<i64: 1, 1, 32>}, {pipeline_mode = #tpu.pipeline_mode<synchronous>, transform_indices = @transform_20, window_bounds = array<i64: 32, 128>}, {pipeline_mode = #tpu.pipeline_mode<synchronous>, transform_indices = @transform_21, window_bounds = array<i64: 1, 128>}, {transform_indices = @transform_22, window_bounds = array<i64: 1, 1, 128>}]} {
    %c0_i32 = arith.constant 0 : i32
    %0 = arith.cmpi eq, %arg1, %c0_i32 : i32
    %1 = arith.extui %0 : i1 to i32
    %c0_i32_0 = arith.constant 0 : i32
    %2 = arith.cmpi ne, %1, %c0_i32_0 : i32
    scf.if %2 {
      %c0_91 = arith.constant 0 : index
      %c0_92 = arith.constant 0 : index
      %c0_93 = arith.constant 0 : index
      %225 = vector.load %arg2[%c0_91, %c0_92, %c0_93] : memref<1x8x4xf32, #tpu.memory_space<vmem>>, vector<1x8x4xf32>
      %226 = vector.shape_cast %225 : vector<1x8x4xf32> to vector<8x4xf32>
      %c0_94 = arith.constant 0 : index
      %c0_95 = arith.constant 0 : index
      %227 = vector.load %arg4[%c0_94, %c0_95] : memref<4x32xbf16, #tpu.memory_space<vmem>>, vector<4x32xbf16>
      %c0_96 = arith.constant 0 : index
      %c0_97 = arith.constant 0 : index
      %228 = vector.load %arg5[%c0_96, %c0_97] : memref<1x32xf32, #tpu.memory_space<vmem>>, vector<1x32xf32>
      %229 = arith.truncf %226 : vector<8x4xf32> to vector<8x4xbf16>
      %cst_98 = arith.constant dense<0.000000e+00> : vector<8x32xf32>
      %230 = tpu.matmul %229, %227, %cst_98 {dimension_numbers = #tpu.dot_dimension_numbers<[1], [0], [0], [1], [0, 0, 1, 1], [], []>} : vector<8x4xbf16>, vector<4x32xbf16>, vector<8x32xf32> -> vector<8x32xf32>
      %231 = vector.broadcast %228 : vector<1x32xf32> to vector<8x32xf32>
      %232 = arith.addf %230, %231 : vector<8x32xf32>
      %c0_99 = arith.constant 0 : index
      %c0_100 = arith.constant 0 : index
      %233 = vector.load %arg6[%c0_99, %c0_100] : memref<32x32xbf16, #tpu.memory_space<vmem>>, vector<32x32xbf16>
      %c0_101 = arith.constant 0 : index
      %c0_102 = arith.constant 0 : index
      %234 = vector.load %arg7[%c0_101, %c0_102] : memref<1x32xf32, #tpu.memory_space<vmem>>, vector<1x32xf32>
      %235 = arith.truncf %232 : vector<8x32xf32> to vector<8x32xbf16>
      %cst_103 = arith.constant dense<0.000000e+00> : vector<8x32xf32>
      %236 = tpu.matmul %235, %233, %cst_103 {dimension_numbers = #tpu.dot_dimension_numbers<[1], [0], [0], [1], [0, 0, 1, 1], [], []>} : vector<8x32xbf16>, vector<32x32xbf16>, vector<8x32xf32> -> vector<8x32xf32>
      %237 = vector.broadcast %234 : vector<1x32xf32> to vector<8x32xf32>
      %238 = arith.addf %236, %237 : vector<8x32xf32>
      %239 = vector.shape_cast %238 : vector<8x32xf32> to vector<1x8x32xf32>
      %c0_104 = arith.constant 0 : index
      %c0_105 = arith.constant 0 : index
      %240 = vector.load %arg3[%c0_104, %c0_105] : memref<8x32xf32, #tpu.memory_space<vmem>>, vector<8x32xf32>
      %241 = vector.shape_cast %240 : vector<8x32xf32> to vector<1x8x32xf32>
      %242 = arith.addf %239, %241 : vector<1x8x32xf32>
      %c0_106 = arith.constant 0 : index
      %c0_107 = arith.constant 0 : index
      %243 = vector.load %arg8[%c0_106, %c0_107] : memref<1x32xf32, #tpu.memory_space<vmem>>, vector<1x32xf32>
      %c0_108 = arith.constant 0 : index
      %c0_109 = arith.constant 0 : index
      %244 = vector.load %arg9[%c0_108, %c0_109] : memref<1x32xf32, #tpu.memory_space<vmem>>, vector<1x32xf32>
      %cst_110 = arith.constant dense<0.000000e+00> : vector<1x8xf32>
      %245 = vector.multi_reduction <add>, %242, %cst_110 [2] : vector<1x8x32xf32> to vector<1x8xf32>
      %246 = vector.shape_cast %245 : vector<1x8xf32> to vector<1x8x1xf32>
      %cst_111 = arith.constant 3.200000e+01 : f32
      %247 = vector.broadcast %cst_111 : f32 to vector<1x8x1xf32>
      %248 = arith.divf %246, %247 : vector<1x8x1xf32>
      %249 = vector.broadcast %248 : vector<1x8x1xf32> to vector<1x8x32xf32>
      %250 = arith.subf %242, %249 : vector<1x8x32xf32>
      %251 = arith.mulf %250, %250 : vector<1x8x32xf32>
      %cst_112 = arith.constant dense<0.000000e+00> : vector<1x8xf32>
      %252 = vector.multi_reduction <add>, %251, %cst_112 [2] : vector<1x8x32xf32> to vector<1x8xf32>
      %253 = vector.shape_cast %252 : vector<1x8xf32> to vector<1x8x1xf32>
      %cst_113 = arith.constant 3.200000e+01 : f32
      %254 = vector.broadcast %cst_113 : f32 to vector<1x8x1xf32>
      %255 = arith.divf %253, %254 : vector<1x8x1xf32>
      %cst_114 = arith.constant 9.99999996E-13 : f32
      %256 = vector.broadcast %cst_114 : f32 to vector<1x8x1xf32>
      %257 = arith.addf %255, %256 : vector<1x8x1xf32>
      %258 = math.rsqrt %257 : vector<1x8x1xf32>
      %259 = vector.broadcast %258 : vector<1x8x1xf32> to vector<1x8x32xf32>
      %260 = arith.mulf %250, %259 : vector<1x8x32xf32>
      %261 = vector.shape_cast %243 : vector<1x32xf32> to vector<1x1x32xf32>
      %262 = vector.broadcast %261 : vector<1x1x32xf32> to vector<1x8x32xf32>
      %263 = arith.mulf %260, %262 : vector<1x8x32xf32>
      %264 = vector.shape_cast %244 : vector<1x32xf32> to vector<1x1x32xf32>
      %265 = vector.broadcast %264 : vector<1x1x32xf32> to vector<1x8x32xf32>
      %266 = arith.addf %263, %265 : vector<1x8x32xf32>
      %c0_115 = arith.constant 0 : index
      %c0_116 = arith.constant 0 : index
      %c0_117 = arith.constant 0 : index
      %267 = vector.load %arg25[%c0_115, %c0_116, %c0_117] : memref<1x8x32xf32, #tpu.memory_space<vmem>>, vector<1x8x32xf32>
      tpu.vector_store %arg25[%c0_115, %c0_116, %c0_117], %266 {strides = array<i32>} : memref<1x8x32xf32, #tpu.memory_space<vmem>>, vector<1x8x32xf32>,
    } else {
    }
    %c0 = arith.constant 0 : index
    %c0_1 = arith.constant 0 : index
    %c0_2 = arith.constant 0 : index
    %3 = vector.load %arg25[%c0, %c0_1, %c0_2] : memref<1x8x32xf32, #tpu.memory_space<vmem>>, vector<1x8x32xf32>
    %c0_3 = arith.constant 0 : index
    %c0_4 = arith.constant 0 : index
    %c0_5 = arith.constant 0 : index
    %4 = vector.load %arg10[%c0_3, %c0_4, %c0_5] : memref<1x1x32xf32, #tpu.memory_space<vmem>>, vector<1x1x32xf32>
    %5 = vector.shape_cast %4 : vector<1x1x32xf32> to vector<1x32xf32>
    %c0_6 = arith.constant 0 : index
    %c0_7 = arith.constant 0 : index
    %c0_8 = arith.constant 0 : index
    %6 = vector.load %arg11[%c0_6, %c0_7, %c0_8] : memref<1x1x32xf32, #tpu.memory_space<vmem>>, vector<1x1x32xf32>
    %7 = vector.shape_cast %6 : vector<1x1x32xf32> to vector<1x32xf32>
    %cst = arith.constant dense<0.000000e+00> : vector<1x8xf32>
    %8 = vector.multi_reduction <add>, %3, %cst [2] : vector<1x8x32xf32> to vector<1x8xf32>
    %9 = vector.shape_cast %8 : vector<1x8xf32> to vector<1x8x1xf32>
    %cst_9 = arith.constant 3.200000e+01 : f32
    %10 = vector.broadcast %cst_9 : f32 to vector<1x8x1xf32>
    %11 = arith.divf %9, %10 : vector<1x8x1xf32>
    %12 = vector.broadcast %11 : vector<1x8x1xf32> to vector<1x8x32xf32>
    %13 = arith.subf %3, %12 : vector<1x8x32xf32>
    %14 = arith.mulf %13, %13 : vector<1x8x32xf32>
    %cst_10 = arith.constant dense<0.000000e+00> : vector<1x8xf32>
    %15 = vector.multi_reduction <add>, %14, %cst_10 [2] : vector<1x8x32xf32> to vector<1x8xf32>
    %16 = vector.shape_cast %15 : vector<1x8xf32> to vector<1x8x1xf32>
    %cst_11 = arith.constant 3.200000e+01 : f32
    %17 = vector.broadcast %cst_11 : f32 to vector<1x8x1xf32>
    %18 = arith.divf %16, %17 : vector<1x8x1xf32>
    %cst_12 = arith.constant 9.99999974E-6 : f32
    %19 = vector.broadcast %cst_12 : f32 to vector<1x8x1xf32>
    %20 = arith.addf %18, %19 : vector<1x8x1xf32>
    %21 = math.rsqrt %20 : vector<1x8x1xf32>
    %22 = vector.broadcast %21 : vector<1x8x1xf32> to vector<1x8x32xf32>
    %23 = arith.mulf %13, %22 : vector<1x8x32xf32>
    %24 = vector.shape_cast %5 : vector<1x32xf32> to vector<1x1x32xf32>
    %25 = vector.broadcast %24 : vector<1x1x32xf32> to vector<1x8x32xf32>
    %26 = arith.mulf %23, %25 : vector<1x8x32xf32>
    %27 = vector.shape_cast %7 : vector<1x32xf32> to vector<1x1x32xf32>
    %28 = vector.broadcast %27 : vector<1x1x32xf32> to vector<1x8x32xf32>
    %29 = arith.addf %26, %28 : vector<1x8x32xf32>
    %30 = vector.shape_cast %29 : vector<1x8x32xf32> to vector<8x32xf32>
    %c0_13 = arith.constant 0 : index
    %c0_14 = arith.constant 0 : index
    %c0_15 = arith.constant 0 : index
    %31 = vector.load %arg12[%c0_13, %c0_14, %c0_15] : memref<1x32x96xbf16, #tpu.memory_space<vmem>>, vector<1x32x96xbf16>
    %32 = vector.shape_cast %31 : vector<1x32x96xbf16> to vector<32x96xbf16>
    %c0_16 = arith.constant 0 : index
    %c0_17 = arith.constant 0 : index
    %c0_18 = arith.constant 0 : index
    %33 = vector.load %arg13[%c0_16, %c0_17, %c0_18] : memref<1x1x96xf32, #tpu.memory_space<vmem>>, vector<1x1x96xf32>
    %34 = vector.shape_cast %33 : vector<1x1x96xf32> to vector<1x96xf32>
    %35 = arith.truncf %30 : vector<8x32xf32> to vector<8x32xbf16>
    %cst_19 = arith.constant dense<0.000000e+00> : vector<8x96xf32>
    %36 = tpu.matmul %35, %32, %cst_19 {dimension_numbers = #tpu.dot_dimension_numbers<[1], [0], [0], [1], [0, 0, 1, 1], [], []>} : vector<8x32xbf16>, vector<32x96xbf16>, vector<8x96xf32> -> vector<8x96xf32>
    %37 = vector.broadcast %34 : vector<1x96xf32> to vector<8x96xf32>
    %38 = arith.addf %36, %37 : vector<8x96xf32>
    %39 = vector.shape_cast %38 : vector<8x96xf32> to vector<1x8x96xf32>
    %40 = arith.truncf %39 : vector<1x8x96xf32> to vector<1x8x96xbf16>
    %41 = vector.extract_strided_slice %40 {offsets = [0, 0, 0], sizes = [1, 8, 8], strides = [1, 1, 1]} : vector<1x8x96xbf16> to vector<1x8x8xbf16>
    %42 = vector.extract_strided_slice %40 {offsets = [0, 0, 32], sizes = [1, 8, 8], strides = [1, 1, 1]} : vector<1x8x96xbf16> to vector<1x8x8xbf16>
    %43 = vector.extract_strided_slice %40 {offsets = [0, 0, 64], sizes = [1, 8, 8], strides = [1, 1, 1]} : vector<1x8x96xbf16> to vector<1x8x8xbf16>
    %cst_20 = arith.constant dense<0.000000e+00> : vector<1x8x8xf32>
    %44 = tpu.matmul %41, %42, %cst_20 {dimension_numbers = #tpu.dot_dimension_numbers<[2], [2], [1], [1], [0, 0, 0, 1, 1, 1], [0], [0]>} : vector<1x8x8xbf16>, vector<1x8x8xbf16>, vector<1x8x8xf32> -> vector<1x8x8xf32>
    %cst_21 = arith.constant dense<0xFF800000> : vector<1x8xf32>
    %45 = vector.multi_reduction <maximumf>, %44, %cst_21 [2] : vector<1x8x8xf32> to vector<1x8xf32>
    %46 = vector.shape_cast %45 : vector<1x8xf32> to vector<1x8x1xf32>
    %47 = vector.broadcast %46 : vector<1x8x1xf32> to vector<1x8x8xf32>
    %48 = arith.subf %44, %47 : vector<1x8x8xf32>
    %49 = math.exp %48 : vector<1x8x8xf32>
    %cst_22 = arith.constant dense<0.000000e+00> : vector<1x8xf32>
    %50 = vector.multi_reduction <add>, %49, %cst_22 [2] : vector<1x8x8xf32> to vector<1x8xf32>
    %51 = vector.shape_cast %50 : vector<1x8xf32> to vector<1x8x1xf32>
    %52 = tpu.reciprocal %51 {approx = true} : vector<1x8x1xf32> -> vector<1x8x1xf32>
    %53 = arith.mulf %51, %52 : vector<1x8x1xf32>
    %cst_23 = arith.constant 2.000000e+00 : f32
    %54 = vector.broadcast %cst_23 : f32 to vector<1x8x1xf32>
    %55 = arith.subf %54, %53 : vector<1x8x1xf32>
    %56 = arith.mulf %52, %55 : vector<1x8x1xf32>
    %57 = vector.broadcast %56 : vector<1x8x1xf32> to vector<1x8x8xf32>
    %58 = arith.mulf %49, %57 : vector<1x8x8xf32>
    %59 = arith.truncf %58 : vector<1x8x8xf32> to vector<1x8x8xbf16>
    %cst_24 = arith.constant dense<0.000000e+00> : vector<1x8x8xf32>
    %60 = tpu.matmul %59, %43, %cst_24 {dimension_numbers = #tpu.dot_dimension_numbers<[2], [1], [1], [2], [0, 0, 0, 1, 1, 2], [0], [0]>} : vector<1x8x8xbf16>, vector<1x8x8xbf16>, vector<1x8x8xf32> -> vector<1x8x8xf32>
    %61 = vector.extract_strided_slice %40 {offsets = [0, 0, 8], sizes = [1, 8, 8], strides = [1, 1, 1]} : vector<1x8x96xbf16> to vector<1x8x8xbf16>
    %62 = vector.extract_strided_slice %40 {offsets = [0, 0, 40], sizes = [1, 8, 8], strides = [1, 1, 1]} : vector<1x8x96xbf16> to vector<1x8x8xbf16>
    %63 = vector.extract_strided_slice %40 {offsets = [0, 0, 72], sizes = [1, 8, 8], strides = [1, 1, 1]} : vector<1x8x96xbf16> to vector<1x8x8xbf16>
    %cst_25 = arith.constant dense<0.000000e+00> : vector<1x8x8xf32>
    %64 = tpu.matmul %61, %62, %cst_25 {dimension_numbers = #tpu.dot_dimension_numbers<[2], [2], [1], [1], [0, 0, 0, 1, 1, 1], [0], [0]>} : vector<1x8x8xbf16>, vector<1x8x8xbf16>, vector<1x8x8xf32> -> vector<1x8x8xf32>
    %cst_26 = arith.constant dense<0xFF800000> : vector<1x8xf32>
    %65 = vector.multi_reduction <maximumf>, %64, %cst_26 [2] : vector<1x8x8xf32> to vector<1x8xf32>
    %66 = vector.shape_cast %65 : vector<1x8xf32> to vector<1x8x1xf32>
    %67 = vector.broadcast %66 : vector<1x8x1xf32> to vector<1x8x8xf32>
    %68 = arith.subf %64, %67 : vector<1x8x8xf32>
    %69 = math.exp %68 : vector<1x8x8xf32>
    %cst_27 = arith.constant dense<0.000000e+00> : vector<1x8xf32>
    %70 = vector.multi_reduction <add>, %69, %cst_27 [2] : vector<1x8x8xf32> to vector<1x8xf32>
    %71 = vector.shape_cast %70 : vector<1x8xf32> to vector<1x8x1xf32>
    %72 = tpu.reciprocal %71 {approx = true} : vector<1x8x1xf32> -> vector<1x8x1xf32>
    %73 = arith.mulf %71, %72 : vector<1x8x1xf32>
    %cst_28 = arith.constant 2.000000e+00 : f32
    %74 = vector.broadcast %cst_28 : f32 to vector<1x8x1xf32>
    %75 = arith.subf %74, %73 : vector<1x8x1xf32>
    %76 = arith.mulf %72, %75 : vector<1x8x1xf32>
    %77 = vector.broadcast %76 : vector<1x8x1xf32> to vector<1x8x8xf32>
    %78 = arith.mulf %69, %77 : vector<1x8x8xf32>
    %79 = arith.truncf %78 : vector<1x8x8xf32> to vector<1x8x8xbf16>
    %cst_29 = arith.constant dense<0.000000e+00> : vector<1x8x8xf32>
    %80 = tpu.matmul %79, %63, %cst_29 {dimension_numbers = #tpu.dot_dimension_numbers<[2], [1], [1], [2], [0, 0, 0, 1, 1, 2], [0], [0]>} : vector<1x8x8xbf16>, vector<1x8x8xbf16>, vector<1x8x8xf32> -> vector<1x8x8xf32>
    %81 = vector.extract_strided_slice %40 {offsets = [0, 0, 16], sizes = [1, 8, 8], strides = [1, 1, 1]} : vector<1x8x96xbf16> to vector<1x8x8xbf16>
    %82 = vector.extract_strided_slice %40 {offsets = [0, 0, 48], sizes = [1, 8, 8], strides = [1, 1, 1]} : vector<1x8x96xbf16> to vector<1x8x8xbf16>
    %83 = vector.extract_strided_slice %40 {offsets = [0, 0, 80], sizes = [1, 8, 8], strides = [1, 1, 1]} : vector<1x8x96xbf16> to vector<1x8x8xbf16>
    %cst_30 = arith.constant dense<0.000000e+00> : vector<1x8x8xf32>
    %84 = tpu.matmul %81, %82, %cst_30 {dimension_numbers = #tpu.dot_dimension_numbers<[2], [2], [1], [1], [0, 0, 0, 1, 1, 1], [0], [0]>} : vector<1x8x8xbf16>, vector<1x8x8xbf16>, vector<1x8x8xf32> -> vector<1x8x8xf32>
    %cst_31 = arith.constant dense<0xFF800000> : vector<1x8xf32>
    %85 = vector.multi_reduction <maximumf>, %84, %cst_31 [2] : vector<1x8x8xf32> to vector<1x8xf32>
    %86 = vector.shape_cast %85 : vector<1x8xf32> to vector<1x8x1xf32>
    %87 = vector.broadcast %86 : vector<1x8x1xf32> to vector<1x8x8xf32>
    %88 = arith.subf %84, %87 : vector<1x8x8xf32>
    %89 = math.exp %88 : vector<1x8x8xf32>
    %cst_32 = arith.constant dense<0.000000e+00> : vector<1x8xf32>
    %90 = vector.multi_reduction <add>, %89, %cst_32 [2] : vector<1x8x8xf32> to vector<1x8xf32>
    %91 = vector.shape_cast %90 : vector<1x8xf32> to vector<1x8x1xf32>
    %92 = tpu.reciprocal %91 {approx = true} : vector<1x8x1xf32> -> vector<1x8x1xf32>
    %93 = arith.mulf %91, %92 : vector<1x8x1xf32>
    %cst_33 = arith.constant 2.000000e+00 : f32
    %94 = vector.broadcast %cst_33 : f32 to vector<1x8x1xf32>
    %95 = arith.subf %94, %93 : vector<1x8x1xf32>
    %96 = arith.mulf %92, %95 : vector<1x8x1xf32>
    %97 = vector.broadcast %96 : vector<1x8x1xf32> to vector<1x8x8xf32>
    %98 = arith.mulf %89, %97 : vector<1x8x8xf32>
    %99 = arith.truncf %98 : vector<1x8x8xf32> to vector<1x8x8xbf16>
    %cst_34 = arith.constant dense<0.000000e+00> : vector<1x8x8xf32>
    %100 = tpu.matmul %99, %83, %cst_34 {dimension_numbers = #tpu.dot_dimension_numbers<[2], [1], [1], [2], [0, 0, 0, 1, 1, 2], [0], [0]>} : vector<1x8x8xbf16>, vector<1x8x8xbf16>, vector<1x8x8xf32> -> vector<1x8x8xf32>
    %101 = vector.extract_strided_slice %40 {offsets = [0, 0, 24], sizes = [1, 8, 8], strides = [1, 1, 1]} : vector<1x8x96xbf16> to vector<1x8x8xbf16>
    %102 = vector.extract_strided_slice %40 {offsets = [0, 0, 56], sizes = [1, 8, 8], strides = [1, 1, 1]} : vector<1x8x96xbf16> to vector<1x8x8xbf16>
    %103 = vector.extract_strided_slice %40 {offsets = [0, 0, 88], sizes = [1, 8, 8], strides = [1, 1, 1]} : vector<1x8x96xbf16> to vector<1x8x8xbf16>
    %cst_35 = arith.constant dense<0.000000e+00> : vector<1x8x8xf32>
    %104 = tpu.matmul %101, %102, %cst_35 {dimension_numbers = #tpu.dot_dimension_numbers<[2], [2], [1], [1], [0, 0, 0, 1, 1, 1], [0], [0]>} : vector<1x8x8xbf16>, vector<1x8x8xbf16>, vector<1x8x8xf32> -> vector<1x8x8xf32>
    %cst_36 = arith.constant dense<0xFF800000> : vector<1x8xf32>
    %105 = vector.multi_reduction <maximumf>, %104, %cst_36 [2] : vector<1x8x8xf32> to vector<1x8xf32>
    %106 = vector.shape_cast %105 : vector<1x8xf32> to vector<1x8x1xf32>
    %107 = vector.broadcast %106 : vector<1x8x1xf32> to vector<1x8x8xf32>
    %108 = arith.subf %104, %107 : vector<1x8x8xf32>
    %109 = math.exp %108 : vector<1x8x8xf32>
    %cst_37 = arith.constant dense<0.000000e+00> : vector<1x8xf32>
    %110 = vector.multi_reduction <add>, %109, %cst_37 [2] : vector<1x8x8xf32> to vector<1x8xf32>
    %111 = vector.shape_cast %110 : vector<1x8xf32> to vector<1x8x1xf32>
    %112 = tpu.reciprocal %111 {approx = true} : vector<1x8x1xf32> -> vector<1x8x1xf32>
    %113 = arith.mulf %111, %112 : vector<1x8x1xf32>
    %cst_38 = arith.constant 2.000000e+00 : f32
    %114 = vector.broadcast %cst_38 : f32 to vector<1x8x1xf32>
    %115 = arith.subf %114, %113 : vector<1x8x1xf32>
    %116 = arith.mulf %112, %115 : vector<1x8x1xf32>
    %117 = vector.broadcast %116 : vector<1x8x1xf32> to vector<1x8x8xf32>
    %118 = arith.mulf %109, %117 : vector<1x8x8xf32>
    %119 = arith.truncf %118 : vector<1x8x8xf32> to vector<1x8x8xbf16>
    %cst_39 = arith.constant dense<0.000000e+00> : vector<1x8x8xf32>
    %120 = tpu.matmul %119, %103, %cst_39 {dimension_numbers = #tpu.dot_dimension_numbers<[2], [1], [1], [2], [0, 0, 0, 1, 1, 2], [0], [0]>} : vector<1x8x8xbf16>, vector<1x8x8xbf16>, vector<1x8x8xf32> -> vector<1x8x8xf32>
    %121 = tpu.concatenate %60, %80, %100, %120 in 2 : vector<1x8x8xf32>, vector<1x8x8xf32>, vector<1x8x8xf32>, vector<1x8x8xf32> -> vector<1x8x32xf32>
    %122 = vector.shape_cast %121 : vector<1x8x32xf32> to vector<8x32xf32>
    %c0_40 = arith.constant 0 : index
    %c0_41 = arith.constant 0 : index
    %c0_42 = arith.constant 0 : index
    %123 = vector.load %arg14[%c0_40, %c0_41, %c0_42] : memref<1x32x32xbf16, #tpu.memory_space<vmem>>, vector<1x32x32xbf16>
    %124 = vector.shape_cast %123 : vector<1x32x32xbf16> to vector<32x32xbf16>
    %c0_43 = arith.constant 0 : index
    %c0_44 = arith.constant 0 : index
    %c0_45 = arith.constant 0 : index
    %125 = vector.load %arg15[%c0_43, %c0_44, %c0_45] : memref<1x1x32xf32, #tpu.memory_space<vmem>>, vector<1x1x32xf32>
    %126 = vector.shape_cast %125 : vector<1x1x32xf32> to vector<1x32xf32>
    %127 = arith.truncf %122 : vector<8x32xf32> to vector<8x32xbf16>
    %cst_46 = arith.constant dense<0.000000e+00> : vector<8x32xf32>
    %128 = tpu.matmul %127, %124, %cst_46 {dimension_numbers = #tpu.dot_dimension_numbers<[1], [0], [0], [1], [0, 0, 1, 1], [], []>} : vector<8x32xbf16>, vector<32x32xbf16>, vector<8x32xf32> -> vector<8x32xf32>
    %129 = vector.broadcast %126 : vector<1x32xf32> to vector<8x32xf32>
    %130 = arith.addf %128, %129 : vector<8x32xf32>
    %131 = vector.shape_cast %130 : vector<8x32xf32> to vector<1x8x32xf32>
    %132 = arith.addf %3, %131 : vector<1x8x32xf32>
    %c0_47 = arith.constant 0 : index
    %c0_48 = arith.constant 0 : index
    %c0_49 = arith.constant 0 : index
    %133 = vector.load %arg16[%c0_47, %c0_48, %c0_49] : memref<1x1x32xf32, #tpu.memory_space<vmem>>, vector<1x1x32xf32>
    %134 = vector.shape_cast %133 : vector<1x1x32xf32> to vector<1x32xf32>
    %c0_50 = arith.constant 0 : index
    %c0_51 = arith.constant 0 : index
    %c0_52 = arith.constant 0 : index
    %135 = vector.load %arg17[%c0_50, %c0_51, %c0_52] : memref<1x1x32xf32, #tpu.memory_space<vmem>>, vector<1x1x32xf32>
    %136 = vector.shape_cast %135 : vector<1x1x32xf32> to vector<1x32xf32>
    %cst_53 = arith.constant dense<0.000000e+00> : vector<1x8xf32>
    %137 = vector.multi_reduction <add>, %132, %cst_53 [2] : vector<1x8x32xf32> to vector<1x8xf32>
    %138 = vector.shape_cast %137 : vector<1x8xf32> to vector<1x8x1xf32>
    %cst_54 = arith.constant 3.200000e+01 : f32
    %139 = vector.broadcast %cst_54 : f32 to vector<1x8x1xf32>
    %140 = arith.divf %138, %139 : vector<1x8x1xf32>
    %141 = vector.broadcast %140 : vector<1x8x1xf32> to vector<1x8x32xf32>
    %142 = arith.subf %132, %141 : vector<1x8x32xf32>
    %143 = arith.mulf %142, %142 : vector<1x8x32xf32>
    %cst_55 = arith.constant dense<0.000000e+00> : vector<1x8xf32>
    %144 = vector.multi_reduction <add>, %143, %cst_55 [2] : vector<1x8x32xf32> to vector<1x8xf32>
    %145 = vector.shape_cast %144 : vector<1x8xf32> to vector<1x8x1xf32>
    %cst_56 = arith.constant 3.200000e+01 : f32
    %146 = vector.broadcast %cst_56 : f32 to vector<1x8x1xf32>
    %147 = arith.divf %145, %146 : vector<1x8x1xf32>
    %cst_57 = arith.constant 9.99999974E-6 : f32
    %148 = vector.broadcast %cst_57 : f32 to vector<1x8x1xf32>
    %149 = arith.addf %147, %148 : vector<1x8x1xf32>
    %150 = math.rsqrt %149 : vector<1x8x1xf32>
    %151 = vector.broadcast %150 : vector<1x8x1xf32> to vector<1x8x32xf32>
    %152 = arith.mulf %142, %151 : vector<1x8x32xf32>
    %153 = vector.shape_cast %134 : vector<1x32xf32> to vector<1x1x32xf32>
    %154 = vector.broadcast %153 : vector<1x1x32xf32> to vector<1x8x32xf32>
    %155 = arith.mulf %152, %154 : vector<1x8x32xf32>
    %156 = vector.shape_cast %136 : vector<1x32xf32> to vector<1x1x32xf32>
    %157 = vector.broadcast %156 : vector<1x1x32xf32> to vector<1x8x32xf32>
    %158 = arith.addf %155, %157 : vector<1x8x32xf32>
    %159 = vector.shape_cast %158 : vector<1x8x32xf32> to vector<8x32xf32>
    %c0_58 = arith.constant 0 : index
    %c0_59 = arith.constant 0 : index
    %c0_60 = arith.constant 0 : index
    %160 = vector.load %arg18[%c0_58, %c0_59, %c0_60] : memref<1x32x64xbf16, #tpu.memory_space<vmem>>, vector<1x32x64xbf16>
    %161 = vector.shape_cast %160 : vector<1x32x64xbf16> to vector<32x64xbf16>
    %c0_61 = arith.constant 0 : index
    %c0_62 = arith.constant 0 : index
    %c0_63 = arith.constant 0 : index
    %162 = vector.load %arg19[%c0_61, %c0_62, %c0_63] : memref<1x1x64xf32, #tpu.memory_space<vmem>>, vector<1x1x64xf32>
    %163 = vector.shape_cast %162 : vector<1x1x64xf32> to vector<1x64xf32>
    %164 = arith.truncf %159 : vector<8x32xf32> to vector<8x32xbf16>
    %cst_64 = arith.constant dense<0.000000e+00> : vector<8x64xf32>
    %165 = tpu.matmul %164, %161, %cst_64 {dimension_numbers = #tpu.dot_dimension_numbers<[1], [0], [0], [1], [0, 0, 1, 1], [], []>} : vector<8x32xbf16>, vector<32x64xbf16>, vector<8x64xf32> -> vector<8x64xf32>
    %166 = vector.broadcast %163 : vector<1x64xf32> to vector<8x64xf32>
    %167 = arith.addf %165, %166 : vector<8x64xf32>
    %cst_65 = arith.constant 5.000000e-01 : f32
    %168 = vector.broadcast %cst_65 : f32 to vector<8x64xf32>
    %169 = arith.mulf %168, %167 : vector<8x64xf32>
    %cst_66 = arith.constant 0.707106769 : f32
    %170 = vector.broadcast %cst_66 : f32 to vector<8x64xf32>
    %171 = arith.mulf %167, %170 : vector<8x64xf32>
    %172 = math.absf %171 : vector<8x64xf32>
    %cst_67 = arith.constant 0.327591091 : f32
    %173 = vector.broadcast %cst_67 : f32 to vector<8x64xf32>
    %174 = arith.mulf %173, %172 : vector<8x64xf32>
    %cst_68 = arith.constant 1.000000e+00 : f32
    %175 = vector.broadcast %cst_68 : f32 to vector<8x64xf32>
    %176 = arith.addf %175, %174 : vector<8x64xf32>
    %177 = tpu.reciprocal %176 {approx = true} : vector<8x64xf32> -> vector<8x64xf32>
    %178 = arith.mulf %176, %177 : vector<8x64xf32>
    %cst_69 = arith.constant 2.000000e+00 : f32
    %179 = vector.broadcast %cst_69 : f32 to vector<8x64xf32>
    %180 = arith.subf %179, %178 : vector<8x64xf32>
    %181 = arith.mulf %177, %180 : vector<8x64xf32>
    %cst_70 = arith.constant 1.06140542 : f32
    %182 = vector.broadcast %cst_70 : f32 to vector<8x64xf32>
    %183 = arith.mulf %182, %181 : vector<8x64xf32>
    %cst_71 = arith.constant -1.45315206 : f32
    %184 = vector.broadcast %cst_71 : f32 to vector<8x64xf32>
    %185 = arith.addf %183, %184 : vector<8x64xf32>
    %186 = arith.mulf %185, %181 : vector<8x64xf32>
    %cst_72 = arith.constant 1.42141378 : f32
    %187 = vector.broadcast %cst_72 : f32 to vector<8x64xf32>
    %188 = arith.addf %186, %187 : vector<8x64xf32>
    %189 = arith.mulf %188, %181 : vector<8x64xf32>
    %cst_73 = arith.constant -0.284496725 : f32
    %190 = vector.broadcast %cst_73 : f32 to vector<8x64xf32>
    %191 = arith.addf %189, %190 : vector<8x64xf32>
    %192 = arith.mulf %191, %181 : vector<8x64xf32>
    %cst_74 = arith.constant 0.254829586 : f32
    %193 = vector.broadcast %cst_74 : f32 to vector<8x64xf32>
    %194 = arith.addf %192, %193 : vector<8x64xf32>
    %195 = arith.mulf %194, %181 : vector<8x64xf32>
    %cst_75 = arith.constant 0.000000e+00 : f32
    %196 = vector.broadcast %cst_75 : f32 to vector<8x64xf32>
    %197 = arith.subf %196, %172 : vector<8x64xf32>
    %198 = arith.mulf %197, %172 : vector<8x64xf32>
    %199 = math.exp %198 : vector<8x64xf32>
    %200 = arith.mulf %195, %199 : vector<8x64xf32>
    %cst_76 = arith.constant 1.000000e+00 : f32
    %201 = vector.broadcast %cst_76 : f32 to vector<8x64xf32>
    %202 = arith.subf %201, %200 : vector<8x64xf32>
    %cst_77 = arith.constant 0.000000e+00 : f32
    %203 = vector.broadcast %cst_77 : f32 to vector<8x64xf32>
    %204 = arith.cmpf olt, %171, %203 : vector<8x64xf32>
    %cst_78 = arith.constant 0.000000e+00 : f32
    %205 = vector.broadcast %cst_78 : f32 to vector<8x64xf32>
    %206 = arith.subf %205, %202 : vector<8x64xf32>
    %207 = arith.select %204, %206, %202 : vector<8x64xi1>, vector<8x64xf32>
    %cst_79 = arith.constant 1.000000e+00 : f32
    %208 = vector.broadcast %cst_79 : f32 to vector<8x64xf32>
    %209 = arith.addf %208, %207 : vector<8x64xf32>
    %210 = arith.mulf %169, %209 : vector<8x64xf32>
    %c0_80 = arith.constant 0 : index
    %c0_81 = arith.constant 0 : index
    %c0_82 = arith.constant 0 : index
    %211 = vector.load %arg20[%c0_80, %c0_81, %c0_82] : memref<1x64x32xbf16, #tpu.memory_space<vmem>>, vector<1x64x32xbf16>
    %212 = vector.shape_cast %211 : vector<1x64x32xbf16> to vector<64x32xbf16>
    %c0_83 = arith.constant 0 : index
    %c0_84 = arith.constant 0 : index
    %c0_85 = arith.constant 0 : index
    %213 = vector.load %arg21[%c0_83, %c0_84, %c0_85] : memref<1x1x32xf32, #tpu.memory_space<vmem>>, vector<1x1x32xf32>
    %214 = vector.shape_cast %213 : vector<1x1x32xf32> to vector<1x32xf32>
    %215 = arith.truncf %210 : vector<8x64xf32> to vector<8x64xbf16>
    %cst_86 = arith.constant dense<0.000000e+00> : vector<8x32xf32>
    %216 = tpu.matmul %215, %212, %cst_86 {dimension_numbers = #tpu.dot_dimension_numbers<[1], [0], [0], [1], [0, 0, 1, 1], [], []>} : vector<8x64xbf16>, vector<64x32xbf16>, vector<8x32xf32> -> vector<8x32xf32>
    %217 = vector.broadcast %214 : vector<1x32xf32> to vector<8x32xf32>
    %218 = arith.addf %216, %217 : vector<8x32xf32>
    %219 = vector.shape_cast %218 : vector<8x32xf32> to vector<1x8x32xf32>
    %220 = arith.addf %132, %219 : vector<1x8x32xf32>
    %c0_87 = arith.constant 0 : index
    %c0_88 = arith.constant 0 : index
    %c0_89 = arith.constant 0 : index
    %221 = vector.load %arg25[%c0_87, %c0_88, %c0_89] : memref<1x8x32xf32, #tpu.memory_space<vmem>>, vector<1x8x32xf32>
    tpu.vector_store %arg25[%c0_87, %c0_88, %c0_89], %220 {strides = array<i32>} : memref<1x8x32xf32, #tpu.memory_space<vmem>>, vector<1x8x32xf32>,
    %c1_i32 = arith.constant 1 : i32
    %222 = arith.cmpi eq, %arg1, %c1_i32 : i32
    %223 = arith.extui %222 : i1 to i32
    %c0_i32_90 = arith.constant 0 : i32
    %224 = arith.cmpi ne, %223, %c0_i32_90 : i32
    scf.if %224 {
      %225 = vector.extract_strided_slice %220 {offsets = [0, 0, 0], sizes = [1, 1, 32], strides = [1, 1, 1]} : vector<1x8x32xf32> to vector<1x1x32xf32>
      %226 = vector.shape_cast %225 : vector<1x1x32xf32> to vector<1x32xf32>
      %c0_91 = arith.constant 0 : index
      %c0_92 = arith.constant 0 : index
      %227 = vector.load %arg22[%c0_91, %c0_92] : memref<32x128xbf16, #tpu.memory_space<vmem>>, vector<32x128xbf16>
      %c0_93 = arith.constant 0 : index
      %c0_94 = arith.constant 0 : index
      %228 = vector.load %arg23[%c0_93, %c0_94] : memref<1x128xf32, #tpu.memory_space<vmem>>, vector<1x128xf32>
      %229 = arith.truncf %226 : vector<1x32xf32> to vector<1x32xbf16>
      %cst_95 = arith.constant dense<0.000000e+00> : vector<1x128xf32>
      %230 = tpu.matmul %229, %227, %cst_95 {dimension_numbers = #tpu.dot_dimension_numbers<[1], [0], [0], [1], [0, 0, 1, 1], [], []>} : vector<1x32xbf16>, vector<32x128xbf16>, vector<1x128xf32> -> vector<1x128xf32>
      %231 = arith.addf %230, %228 : vector<1x128xf32>
      %c0_96 = arith.constant 0 : index
      %c0_97 = arith.constant 0 : index
      %c0_98 = arith.constant 0 : index
      %232 = vector.load %arg24[%c0_96, %c0_97, %c0_98] : memref<1x1x128xf32, #tpu.memory_space<vmem>>, vector<1x1x128xf32>
      %233 = vector.shape_cast %232 : vector<1x1x128xf32> to vector<1x128xf32>
      %234 = vector.shape_cast %231 : vector<1x128xf32> to vector<1x1x128xf32>
      tpu.vector_store %arg24[%c0_96, %c0_97, %c0_98], %234 {strides = array<i32>} : memref<1x1x128xf32, #tpu.memory_space<vmem>>, vector<1x1x128xf32>,
    } else {
    }
    return
  }
  func.func @transform_0(%arg0: i32, %arg1: i32) -> (i32, i32, i32) {
    %c0_i32 = arith.constant 0 : i32
    %c0_i32_0 = arith.constant 0 : i32
    %c0_i32_1 = arith.constant 0 : i32
    return %arg0, %c0_i32, %c0_i32_0 : i32, i32, i32
  }
  func.func @transform_1(%arg0: i32, %arg1: i32) -> (i32, i32) {
    %c0_i32 = arith.constant 0 : i32
    %c0_i32_0 = arith.constant 0 : i32
    %c0_i32_1 = arith.constant 0 : i32
    return %c0_i32, %c0_i32_0 : i32, i32
  }
  func.func @transform_2(%arg0: i32, %arg1: i32) -> (i32, i32) {
    %c0_i32 = arith.constant 0 : i32
    %c0_i32_0 = arith.constant 0 : i32
    %c0_i32_1 = arith.constant 0 : i32
    return %c0_i32, %c0_i32_0 : i32, i32
  }
  func.func @transform_3(%arg0: i32, %arg1: i32) -> (i32, i32) {
    %c0_i32 = arith.constant 0 : i32
    %c0_i32_0 = arith.constant 0 : i32
    %c0_i32_1 = arith.constant 0 : i32
    return %c0_i32, %c0_i32_0 : i32, i32
  }
  func.func @transform_4(%arg0: i32, %arg1: i32) -> (i32, i32) {
    %c0_i32 = arith.constant 0 : i32
    %c0_i32_0 = arith.constant 0 : i32
    %c0_i32_1 = arith.constant 0 : i32
    return %c0_i32, %c0_i32_0 : i32, i32
  }
  func.func @transform_5(%arg0: i32, %arg1: i32) -> (i32, i32) {
    %c0_i32 = arith.constant 0 : i32
    %c0_i32_0 = arith.constant 0 : i32
    %c0_i32_1 = arith.constant 0 : i32
    return %c0_i32, %c0_i32_0 : i32, i32
  }
  func.func @transform_6(%arg0: i32, %arg1: i32) -> (i32, i32) {
    %c0_i32 = arith.constant 0 : i32
    %c0_i32_0 = arith.constant 0 : i32
    %c0_i32_1 = arith.constant 0 : i32
    return %c0_i32, %c0_i32_0 : i32, i32
  }
  func.func @transform_7(%arg0: i32, %arg1: i32) -> (i32, i32) {
    %c0_i32 = arith.constant 0 : i32
    %c0_i32_0 = arith.constant 0 : i32
    %c0_i32_1 = arith.constant 0 : i32
    return %c0_i32, %c0_i32_0 : i32, i32
  }
  func.func @transform_8(%arg0: i32, %arg1: i32) -> (i32, i32, i32) {
    %c0_i32 = arith.constant 0 : i32
    %c0_i32_0 = arith.constant 0 : i32
    %c0_i32_1 = arith.constant 0 : i32
    return %arg1, %c0_i32, %c0_i32_0 : i32, i32, i32
  }
  func.func @transform_9(%arg0: i32, %arg1: i32) -> (i32, i32, i32) {
    %c0_i32 = arith.constant 0 : i32
    %c0_i32_0 = arith.constant 0 : i32
    %c0_i32_1 = arith.constant 0 : i32
    return %arg1, %c0_i32, %c0_i32_0 : i32, i32, i32
  }
  func.func @transform_10(%arg0: i32, %arg1: i32) -> (i32, i32, i32) {
    %c0_i32 = arith.constant 0 : i32
    %c0_i32_0 = arith.constant 0 : i32
    %c0_i32_1 = arith.constant 0 : i32
    return %arg1, %c0_i32, %c0_i32_0 : i32, i32, i32
  }
  func.func @transform_11(%arg0: i32, %arg1: i32) -> (i32, i32, i32) {
    %c0_i32 = arith.constant 0 : i32
    %c0_i32_0 = arith.constant 0 : i32
    %c0_i32_1 = arith.constant 0 : i32
    return %arg1, %c0_i32, %c0_i32_0 : i32, i32, i32
  }
  func.func @transform_12(%arg0: i32, %arg1: i32) -> (i32, i32, i32) {
    %c0_i32 = arith.constant 0 : i32
    %c0_i32_0 = arith.constant 0 : i32
    %c0_i32_1 = arith.constant 0 : i32
    return %arg1, %c0_i32, %c0_i32_0 : i32, i32, i32
  }
  func.func @transform_13(%arg0: i32, %arg1: i32) -> (i32, i32, i32) {
    %c0_i32 = arith.constant 0 : i32
    %c0_i32_0 = arith.constant 0 : i32
    %c0_i32_1 = arith.constant 0 : i32
    return %arg1, %c0_i32, %c0_i32_0 : i32, i32, i32
  }
  func.func @transform_14(%arg0: i32, %arg1: i32) -> (i32, i32, i32) {
    %c0_i32 = arith.constant 0 : i32
    %c0_i32_0 = arith.constant 0 : i32
    %c0_i32_1 = arith.constant 0 : i32
    return %arg1, %c0_i32, %c0_i32_0 : i32, i32, i32
  }
  func.func @transform_15(%arg0: i32, %arg1: i32) -> (i32, i32, i32) {
    %c0_i32 = arith.constant 0 : i32
    %c0_i32_0 = arith.constant 0 : i32
    %c0_i32_1 = arith.constant 0 : i32
    return %arg1, %c0_i32, %c0_i32_0 : i32, i32, i32
  }
  func.func @transform_16(%arg0: i32, %arg1: i32) -> (i32, i32, i32) {
    %c0_i32 = arith.constant 0 : i32
    %c0_i32_0 = arith.constant 0 : i32
    %c0_i32_1 = arith.constant 0 : i32
    return %arg1, %c0_i32, %c0_i32_0 : i32, i32, i32
  }
  func.func @transform_17(%arg0: i32, %arg1: i32) -> (i32, i32, i32) {
    %c0_i32 = arith.constant 0 : i32
    %c0_i32_0 = arith.constant 0 : i32
    %c0_i32_1 = arith.constant 0 : i32
    return %arg1, %c0_i32, %c0_i32_0 : i32, i32, i32
  }
  func.func @transform_18(%arg0: i32, %arg1: i32) -> (i32, i32, i32) {
    %c0_i32 = arith.constant 0 : i32
    %c0_i32_0 = arith.constant 0 : i32
    %c0_i32_1 = arith.constant 0 : i32
    return %arg1, %c0_i32, %c0_i32_0 : i32, i32, i32
  }
  func.func @transform_19(%arg0: i32, %arg1: i32) -> (i32, i32, i32) {
    %c0_i32 = arith.constant 0 : i32
    %c0_i32_0 = arith.constant 0 : i32
    %c0_i32_1 = arith.constant 0 : i32
    return %arg1, %c0_i32, %c0_i32_0 : i32, i32, i32
  }
  func.func @transform_20(%arg0: i32, %arg1: i32) -> (i32, i32) {
    %c0_i32 = arith.constant 0 : i32
    %c0_i32_0 = arith.constant 0 : i32
    %c0_i32_1 = arith.constant 0 : i32
    return %c0_i32, %c0_i32_0 : i32, i32
  }
  func.func @transform_21(%arg0: i32, %arg1: i32) -> (i32, i32) {
    %c0_i32 = arith.constant 0 : i32
    %c0_i32_0 = arith.constant 0 : i32
    %c0_i32_1 = arith.constant 0 : i32
    return %c0_i32, %c0_i32_0 : i32, i32
  }
  func.func @transform_22(%arg0: i32, %arg1: i32) -> (i32, i32, i32) {
    %c0_i32 = arith.constant 0 : i32
    %c0_i32_0 = arith.constant 0 : i32
    %c0_i32_1 = arith.constant 0 : i32
    return %arg0, %c0_i32, %c0_i32_0 : i32, i32, i32
  }
}

</mosaic_0001>

<llo_original>
// kernel: tpu_custom_call.1
$region0: #{tpu_custom_call.1}
  #allocation0 [shape = 'u32[]', space=smem, size = 0x4, offset = 0x4, fixed_abs, tag = 'smem constant byte address 0x4 - core index']
  #allocation1 [shape = 'u32[144,128]{1,0:T(1,128)}', space=vmem, size = 0x12000, scoped, tag = 'internal scratch']
  #allocation2 [shape = 'f32[1,8,32]{2,1,0:T(8,128)}', space=vmem, size = 0x1000, scoped, tag = 'scratch operand']
  %s0 = inlined_call_operand.vmem [shape: f32[2,8,4], index: 0, kind: input, shape index: {}]
  %s1 = inlined_call_operand.hbm [shape: f32[8,32], index: 1, kind: input, shape index: {}]
  %s2 = inlined_call_operand.hbm [shape: bf16[4,32], index: 2, kind: input, shape index: {}]
  %s3 = inlined_call_operand.vmem [shape: f32[1,32], index: 3, kind: input, shape index: {}]
  %s4 = inlined_call_operand.vmem [shape: bf16[32,32], index: 4, kind: input, shape index: {}]
  %s5 = inlined_call_operand.hbm [shape: f32[1,32], index: 5, kind: input, shape index: {}]
  %s6 = inlined_call_operand.hbm [shape: f32[1,32], index: 6, kind: input, shape index: {}]
  %s7 = inlined_call_operand.hbm [shape: f32[1,32], index: 7, kind: input, shape index: {}]
  %s8 = inlined_call_operand.hbm [shape: f32[2,1,32], index: 8, kind: input, shape index: {}]
  %s9 = inlined_call_operand.hbm [shape: f32[2,1,32], index: 9, kind: input, shape index: {}]
  %s10 = inlined_call_operand.vmem [shape: bf16[2,32,96], index: 10, kind: input, shape index: {}]
  %s11 = inlined_call_operand.hbm [shape: f32[2,1,96], index: 11, kind: input, shape index: {}]
  %s12 = inlined_call_operand.vmem [shape: bf16[2,32,32], index: 12, kind: input, shape index: {}]
  %s13 = inlined_call_operand.vmem [shape: f32[2,1,32], index: 13, kind: input, shape index: {}]
  %s14 = inlined_call_operand.vmem [shape: f32[2,1,32], index: 14, kind: input, shape index: {}]
  %s15 = inlined_call_operand.vmem [shape: f32[2,1,32], index: 15, kind: input, shape index: {}]
  %s16 = inlined_call_operand.vmem [shape: bf16[2,32,64], index: 16, kind: input, shape index: {}]
  %s17 = inlined_call_operand.vmem [shape: f32[2,1,64], index: 17, kind: input, shape index: {}]
  %s18 = inlined_call_operand.vmem [shape: bf16[2,64,32], index: 18, kind: input, shape index: {}]
  %s19 = inlined_call_operand.vmem [shape: f32[2,1,32], index: 19, kind: input, shape index: {}]
  %s20 = inlined_call_operand.vmem [shape: bf16[32,128], index: 20, kind: input, shape index: {}]
  %s21 = inlined_call_operand.vmem [shape: f32[1,128], index: 21, kind: input, shape index: {}]
  %s22 = inlined_call_operand.hbm [shape: f32[2,1,128], index: 22, kind: output, shape index: {}]
  %s23 = sld [smem:[#allocation0]]
  $region161: #{tpu_custom_call.1} parent=0
    _
  %s25 = ssub.s32 1, %s23
  %s26 = scalar_select 0, %s25, %s23
  $region1: #{tpu_custom_call.1} parent=0
    #allocation3 [shape = 'u8[4096]{0}', space=vmem, size = 0x1000, scoped, tag = 'input window, operand 1, single buffered']
    #allocation4 [shape = 's32[2]{0}', space=sflag, size = 0x8, scoped, tag = 'scoped memory for tpu_custom_call.1']
    #allocation5 [shape = 's32[2]{0}', space=sflag, size = 0x8, scoped, tag = 'scoped memory for tpu_custom_call.1']
    #allocation6 [shape = 'u8[1024]{0}', space=vmem, size = 0x400, scoped, tag = 'input window, operand 2, single buffered']
    #allocation7 [shape = 's32[1]{0}', space=sflag, size = 0x4, scoped, tag = 'scoped memory for tpu_custom_call.1']
    #allocation8 [shape = 'u8[512]{0}', space=vmem, size = 0x400, scoped, tag = 'input window, operand 5, single buffered']
    #allocation9 [shape = 'u8[512]{0}', space=vmem, size = 0x400, scoped, tag = 'input window, operand 6, single buffered']
    #allocation10 [shape = 's32[1]{0}', space=sflag, size = 0x4, scoped, tag = 'scoped memory for tpu_custom_call.1']
    #allocation11 [shape = 'u8[512]{0}', space=vmem, size = 0x400, scoped, tag = 'input window, operand 7, single buffered']
    #allocation12 [shape = 'u8[1024]{0}', space=vmem, size = 0x400, scoped, tag = 'input window, operand 8']
    #allocation13 [shape = 's32[2]{0}', space=sflag, size = 0x8, scoped, tag = 'scoped memory for tpu_custom_call.1']
    #allocation14 [shape = 'u8[1024]{0}', space=vmem, size = 0x400, scoped, tag = 'input window, operand 9']
    #allocation15 [shape = 'u8[1024]{0}', space=vmem, size = 0x400, scoped, tag = 'input window, operand 11']
    #allocation16 [shape = 's32[2]{0}', space=sflag, size = 0x8, scoped, tag = 'scoped memory for tpu_custom_call.1']
    #allocation17 [shape = 'u8[1024]{0}', space=vmem, size = 0x400, scoped, tag = 'output window, operand 0']
    %27 = vsyncpa [#allocation4], 0
    %28 = vsyncpa [#allocation7], 0
    %29 = vsyncpa [#allocation10], 0
    %30 = vsyncpa [#allocation13], 0
    %s31 = scalar_lea.sflag [#allocation13], 1
    %32 = vsyncpa %s31, 0
    %33 = vsyncpa [#allocation16], 0
    %s34 = scalar_lea.sflag [#allocation16], 1
    %35 = vsyncpa %s34, 0
    %36 = vsyncpa [#allocation5], 0
    %s37 = scalar_lea.sflag [#allocation5], 1
    %38 = vsyncpa %s37, 0
    loop: start=0, step=1, limit=6
    $region2: #{tpu_custom_call.1} parent=1 // loop_pre_header
      _
    $region3: #{tpu_custom_call.1} parent=1 // loop_header
      %s40 = sphi 0, %s44
      %p41 = scmp.ge.s32.totalorder %s40, 6
      %s47 = sphi 0, %s59
      %s48 = sphi 0, %s55
      %s49 = sphi 0, %s47
      %s50 = sphi 0, %s48
      %s51 = sphi 0, %s49
      %s52 = sphi 0, %s50
      %s62 = sphi 0, %s64
      %s65 = sphi 0, %s62
      %s66 = sphi 0, %s65
      %s82 = sphi 0, %s66
      %s86 = sphi 0, %s86
      %s88 = sphi 0, %s86
      %s89 = sphi 0, %s88
      %s103 = sphi 0, %s89
      %s107 = sphi 0, %s107
      %s109 = sphi 0, %s107
      %s110 = sphi 0, %s109
      %s124 = sphi 0, %s110
      %s128 = sphi 0, %s128
      %s130 = sphi 0, %s128
      %s131 = sphi 0, %s130
      %s145 = sphi 0, %s131
      %s149 = sphi 0, %s149
      %s151 = sphi 0, %s149
      %s152 = sphi 0, %s151
      %s166 = sphi 0, %s152
      %s170 = sphi 0, %s170
      %s172 = sphi 0, %s170
      %s173 = sphi 0, %s172
      %s187 = sphi 0, %s173
      %s191 = sphi 0, %s191
      %s193 = sphi 0, %s191
      %s194 = sphi 0, %s193
      %s208 = sphi 0, %s194
      %s212 = sphi 0, %s212
      %s214 = sphi 0, %s212
      %s215 = sphi 0, %s214
      %s229 = sphi 0, %s215
      %s235 = sphi 0, %s237
      %s238 = sphi 0, %s235
      %s239 = sphi 0, %s238
      %s255 = sphi 0, %s239
      %s261 = sphi 0, %s263
      %s264 = sphi 0, %s261
      %s265 = sphi 0, %s264
      %s281 = sphi 0, %s265
      %s287 = sphi 0, %s289
      %s290 = sphi 0, %s287
      %s291 = sphi 0, %s290
      %s307 = sphi 0, %s291
      %s313 = sphi 0, %s315
      %s316 = sphi 0, %s313
      %s317 = sphi 0, %s316
      %s333 = sphi 0, %s317
      %s339 = sphi 0, %s341
      %s342 = sphi 0, %s339
      %s343 = sphi 0, %s342
      %s359 = sphi 0, %s343
      %s365 = sphi 0, %s367
      %s368 = sphi 0, %s365
      %s369 = sphi 0, %s368
      %s385 = sphi 0, %s369
      %s391 = sphi 0, %s393
      %s394 = sphi 0, %s391
      %s395 = sphi 0, %s394
      %s411 = sphi 0, %s395
      %s417 = sphi 0, %s419
      %s420 = sphi 0, %s417
      %s421 = sphi 0, %s420
      %s437 = sphi 0, %s421
      %s443 = sphi 0, %s445
      %s446 = sphi 0, %s443
      %s447 = sphi 0, %s446
      %s463 = sphi 0, %s447
      %s469 = sphi 0, %s471
      %s472 = sphi 0, %s469
      %s473 = sphi 0, %s472
      %s489 = sphi 0, %s473
      %s495 = sphi 0, %s497
      %s498 = sphi 0, %s495
      %s499 = sphi 0, %s498
      %s515 = sphi 0, %s499
      %s521 = sphi 0, %s523
      %s524 = sphi 0, %s521
      %s525 = sphi 0, %s524
      %s541 = sphi 0, %s525
      %s545 = sphi 0, %s545
      %s547 = sphi 0, %s545
      %s548 = sphi 0, %s547
      %s562 = sphi 0, %s548
      %s566 = sphi 0, %s566
      %s568 = sphi 0, %s566
      %s569 = sphi 0, %s568
      %s583 = sphi 0, %s569
      %s589 = sphi 0, %s591
      %s592 = sphi 0, %s589
      %s593 = sphi 0, %s592
      %s609 = sphi 0, %s593
    $region4: #{tpu_custom_call.1} parent=1 // loop_header_branch
      %43 = sbr.rel (%p41) target = $region8
    $region5: #{tpu_custom_call.1} parent=1 // loop_body
      %s45 = ssub.s32 %s40, 1
      %s46 = ssub.s32 %s40, 2
      %s53 = sadd.s32 1, %s48
      %p54 = scmp.ge.s32.totalorder %s53, 2
      %s55 = scalar_select %p54, 0, %s53
      %s56 = sadd.s32 1, %s47
      %s57 = scalar_select %p54, %s56, %s47
      %p58 = scmp.ge.s32.totalorder %s57, 2
      %s59 = scalar_select %p58, 0, %s57
      %s60 = ssub.s32 %s47, %s59
      %p61 = scmp.eq.s32.totalorder %s60, 0
      %s63 = sadd.s32 %s62, 1
      %s64 = scalar_select %p61, %s62, %s63
      %p67 = pneg %p61
      %p68 = scmp.eq.s32.totalorder %s40, 3
      %p69 = por %p67, %p68
      %p70 = scmp.ne.s32.totalorder %s62, %s65
      %p71 = scmp.eq.s32.totalorder %s40, 0
      %p72 = por %p70, %p71
      %p73 = scmp.ne.s32.totalorder %s62, %s65
      %p74 = scmp.eq.s32.totalorder %s45, 3
      %p75 = por %p73, %p74
      %p76 = scmp.ne.s32.totalorder %s65, %s66
      %p77 = scmp.eq.s32.totalorder %s45, 0
      %p78 = por %p76, %p77
      %p79 = scmp.ne.s32.totalorder %s65, %s66
      %p80 = scmp.eq.s32.totalorder %s46, 3
      %p81 = por %p79, %p80
      %p83 = scmp.ne.s32.totalorder %s66, %s82
      %p84 = scmp.eq.s32.totalorder %s46, 0
      %p85 = por %p83, %p84
      %s87 = sadd.s32 %s86, 1
      %p90 = scmp.eq.s32.totalorder %s40, 3
      %p91 = scmp.ne.s32.totalorder %s86, %s88
      %p92 = scmp.eq.s32.totalorder %s40, 0
      %p93 = por %p91, %p92
      %p94 = scmp.ne.s32.totalorder %s86, %s88
      %p95 = scmp.eq.s32.totalorder %s45, 3
      %p96 = por %p94, %p95
      %p97 = scmp.ne.s32.totalorder %s88, %s89
      %p98 = scmp.eq.s32.totalorder %s45, 0
      %p99 = por %p97, %p98
      %p100 = scmp.ne.s32.totalorder %s88, %s89
      %p101 = scmp.eq.s32.totalorder %s46, 3
      %p102 = por %p100, %p101
      %p104 = scmp.ne.s32.totalorder %s89, %s103
      %p105 = scmp.eq.s32.totalorder %s46, 0
      %p106 = por %p104, %p105
      %s108 = sadd.s32 %s107, 1
      %p111 = scmp.eq.s32.totalorder %s40, 3
      %p112 = scmp.ne.s32.totalorder %s107, %s109
      %p113 = scmp.eq.s32.totalorder %s40, 0
      %p114 = por %p112, %p113
      %p115 = scmp.ne.s32.totalorder %s107, %s109
      %p116 = scmp.eq.s32.totalorder %s45, 3
      %p117 = por %p115, %p116
      %p118 = scmp.ne.s32.totalorder %s109, %s110
      %p119 = scmp.eq.s32.totalorder %s45, 0
      %p120 = por %p118, %p119
      %p121 = scmp.ne.s32.totalorder %s109, %s110
      %p122 = scmp.eq.s32.totalorder %s46, 3
      %p123 = por %p121, %p122
      %p125 = scmp.ne.s32.totalorder %s110, %s124
      %p126 = scmp.eq.s32.totalorder %s46, 0
      %p127 = por %p125, %p126
      %s129 = sadd.s32 %s128, 1
      %p132 = scmp.eq.s32.totalorder %s40, 3
      %p133 = scmp.ne.s32.totalorder %s128, %s130
      %p134 = scmp.eq.s32.totalorder %s40, 0
      %p135 = por %p133, %p134
      %p136 = scmp.ne.s32.totalorder %s128, %s130
      %p137 = scmp.eq.s32.totalorder %s45, 3
      %p138 = por %p136, %p137
      %p139 = scmp.ne.s32.totalorder %s130, %s131
      %p140 = scmp.eq.s32.totalorder %s45, 0
      %p141 = por %p139, %p140
      %p142 = scmp.ne.s32.totalorder %s130, %s131
      %p143 = scmp.eq.s32.totalorder %s46, 3
      %p144 = por %p142, %p143
      %p146 = scmp.ne.s32.totalorder %s131, %s145
      %p147 = scmp.eq.s32.totalorder %s46, 0
      %p148 = por %p146, %p147
      %s150 = sadd.s32 %s149, 1
      %p153 = scmp.eq.s32.totalorder %s40, 3
      %p154 = scmp.ne.s32.totalorder %s149, %s151
      %p155 = scmp.eq.s32.totalorder %s40, 0
      %p156 = por %p154, %p155
      %p157 = scmp.ne.s32.totalorder %s149, %s151
      %p158 = scmp.eq.s32.totalorder %s45, 3
      %p159 = por %p157, %p158
      %p160 = scmp.ne.s32.totalorder %s151, %s152
      %p161 = scmp.eq.s32.totalorder %s45, 0
      %p162 = por %p160, %p161
      %p163 = scmp.ne.s32.totalorder %s151, %s152
      %p164 = scmp.eq.s32.totalorder %s46, 3
      %p165 = por %p163, %p164
      %p167 = scmp.ne.s32.totalorder %s152, %s166
      %p168 = scmp.eq.s32.totalorder %s46, 0
      %p169 = por %p167, %p168
      %s171 = sadd.s32 %s170, 1
      %p174 = scmp.eq.s32.totalorder %s40, 3
      %p175 = scmp.ne.s32.totalorder %s170, %s172
      %p176 = scmp.eq.s32.totalorder %s40, 0
      %p177 = por %p175, %p176
      %p178 = scmp.ne.s32.totalorder %s170, %s172
      %p179 = scmp.eq.s32.totalorder %s45, 3
      %p180 = por %p178, %p179
      %p181 = scmp.ne.s32.totalorder %s172, %s173
      %p182 = scmp.eq.s32.totalorder %s45, 0
      %p183 = por %p181, %p182
      %p184 = scmp.ne.s32.totalorder %s172, %s173
      %p185 = scmp.eq.s32.totalorder %s46, 3
      %p186 = por %p184, %p185
      %p188 = scmp.ne.s32.totalorder %s173, %s187
      %p189 = scmp.eq.s32.totalorder %s46, 0
      %p190 = por %p188, %p189
      %s192 = sadd.s32 %s191, 1
      %p195 = scmp.eq.s32.totalorder %s40, 3
      %p196 = scmp.ne.s32.totalorder %s191, %s193
      %p197 = scmp.eq.s32.totalorder %s40, 0
      %p198 = por %p196, %p197
      %p199 = scmp.ne.s32.totalorder %s191, %s193
      %p200 = scmp.eq.s32.totalorder %s45, 3
      %p201 = por %p199, %p200
      %p202 = scmp.ne.s32.totalorder %s193, %s194
      %p203 = scmp.eq.s32.totalorder %s45, 0
      %p204 = por %p202, %p203
      %p205 = scmp.ne.s32.totalorder %s193, %s194
      %p206 = scmp.eq.s32.totalorder %s46, 3
      %p207 = por %p205, %p206
      %p209 = scmp.ne.s32.totalorder %s194, %s208
      %p210 = scmp.eq.s32.totalorder %s46, 0
      %p211 = por %p209, %p210
      %s213 = sadd.s32 %s212, 1
      %p216 = scmp.eq.s32.totalorder %s40, 3
      %p217 = scmp.ne.s32.totalorder %s212, %s214
      %p218 = scmp.eq.s32.totalorder %s40, 0
      %p219 = por %p217, %p218
      %p220 = scmp.ne.s32.totalorder %s212, %s214
      %p221 = scmp.eq.s32.totalorder %s45, 3
      %p222 = por %p220, %p221
      %p223 = scmp.ne.s32.totalorder %s214, %s215
      %p224 = scmp.eq.s32.totalorder %s45, 0
      %p225 = por %p223, %p224
      %p226 = scmp.ne.s32.totalorder %s214, %s215
      %p227 = scmp.eq.s32.totalorder %s46, 3
      %p228 = por %p226, %p227
      %p230 = scmp.ne.s32.totalorder %s215, %s229
      %p231 = scmp.eq.s32.totalorder %s46, 0
      %p232 = por %p230, %p231
      %s233 = ssub.s32 %s48, %s55
      %p234 = scmp.eq.s32.totalorder %s233, 0
      %s236 = sadd.s32 %s235, 1
      %s237 = scalar_select %p234, %s235, %s236
      %p240 = pneg %p234
      %p241 = scmp.eq.s32.totalorder %s40, 3
      %p242 = por %p240, %p241
      %p243 = scmp.ne.s32.totalorder %s235, %s238
      %p244 = scmp.eq.s32.totalorder %s40, 0
      %p245 = por %p243, %p244
      %p246 = scmp.ne.s32.totalorder %s235, %s238
      %p247 = scmp.eq.s32.totalorder %s45, 3
      %p248 = por %p246, %p247
      %p249 = scmp.ne.s32.totalorder %s238, %s239
      %p250 = scmp.eq.s32.totalorder %s45, 0
      %p251 = por %p249, %p250
      %p252 = scmp.ne.s32.totalorder %s238, %s239
      %p253 = scmp.eq.s32.totalorder %s46, 3
      %p254 = por %p252, %p253
      %p256 = scmp.ne.s32.totalorder %s239, %s255
      %p257 = scmp.eq.s32.totalorder %s46, 0
      %p258 = por %p256, %p257
      %s259 = ssub.s32 %s48, %s55
      %p260 = scmp.eq.s32.totalorder %s259, 0
      %s262 = sadd.s32 %s261, 1
      %s263 = scalar_select %p260, %s261, %s262
      %p266 = pneg %p260
      %p267 = scmp.eq.s32.totalorder %s40, 3
      %p268 = por %p266, %p267
      %p269 = scmp.ne.s32.totalorder %s261, %s264
      %p270 = scmp.eq.s32.totalorder %s40, 0
      %p271 = por %p269, %p270
      %p272 = scmp.ne.s32.totalorder %s261, %s264
      %p273 = scmp.eq.s32.totalorder %s45, 3
      %p274 = por %p272, %p273
      %p275 = scmp.ne.s32.totalorder %s264, %s265
      %p276 = scmp.eq.s32.totalorder %s45, 0
      %p277 = por %p275, %p276
      %p278 = scmp.ne.s32.totalorder %s264, %s265
      %p279 = scmp.eq.s32.totalorder %s46, 3
      %p280 = por %p278, %p279
      %p282 = scmp.ne.s32.totalorder %s265, %s281
      %p283 = scmp.eq.s32.totalorder %s46, 0
      %p284 = por %p282, %p283
      %s285 = ssub.s32 %s48, %s55
      %p286 = scmp.eq.s32.totalorder %s285, 0
      %s288 = sadd.s32 %s287, 1
      %s289 = scalar_select %p286, %s287, %s288
      %p292 = pneg %p286
      %p293 = scmp.eq.s32.totalorder %s40, 3
      %p294 = por %p292, %p293
      %p295 = scmp.ne.s32.totalorder %s287, %s290
      %p296 = scmp.eq.s32.totalorder %s40, 0
      %p297 = por %p295, %p296
      %p298 = scmp.ne.s32.totalorder %s287, %s290
      %p299 = scmp.eq.s32.totalorder %s45, 3
      %p300 = por %p298, %p299
      %p301 = scmp.ne.s32.totalorder %s290, %s291
      %p302 = scmp.eq.s32.totalorder %s45, 0
      %p303 = por %p301, %p302
      %p304 = scmp.ne.s32.totalorder %s290, %s291
      %p305 = scmp.eq.s32.totalorder %s46, 3
      %p306 = por %p304, %p305
      %p308 = scmp.ne.s32.totalorder %s291, %s307
      %p309 = scmp.eq.s32.totalorder %s46, 0
      %p310 = por %p308, %p309
      %s311 = ssub.s32 %s48, %s55
      %p312 = scmp.eq.s32.totalorder %s311, 0
      %s314 = sadd.s32 %s313, 1
      %s315 = scalar_select %p312, %s313, %s314
      %p318 = pneg %p312
      %p319 = scmp.eq.s32.totalorder %s40, 3
      %p320 = por %p318, %p319
      %p321 = scmp.ne.s32.totalorder %s313, %s316
      %p322 = scmp.eq.s32.totalorder %s40, 0
      %p323 = por %p321, %p322
      %p324 = scmp.ne.s32.totalorder %s313, %s316
      %p325 = scmp.eq.s32.totalorder %s45, 3
      %p326 = por %p324, %p325
      %p327 = scmp.ne.s32.totalorder %s316, %s317
      %p328 = scmp.eq.s32.totalorder %s45, 0
      %p329 = por %p327, %p328
      %p330 = scmp.ne.s32.totalorder %s316, %s317
      %p331 = scmp.eq.s32.totalorder %s46, 3
      %p332 = por %p330, %p331
      %p334 = scmp.ne.s32.totalorder %s317, %s333
      %p335 = scmp.eq.s32.totalorder %s46, 0
      %p336 = por %p334, %p335
      %s337 = ssub.s32 %s48, %s55
      %p338 = scmp.eq.s32.totalorder %s337, 0
      %s340 = sadd.s32 %s339, 1
      %s341 = scalar_select %p338, %s339, %s340
      %p344 = pneg %p338
      %p345 = scmp.eq.s32.totalorder %s40, 3
      %p346 = por %p344, %p345
      %p347 = scmp.ne.s32.totalorder %s339, %s342
      %p348 = scmp.eq.s32.totalorder %s40, 0
      %p349 = por %p347, %p348
      %p350 = scmp.ne.s32.totalorder %s339, %s342
      %p351 = scmp.eq.s32.totalorder %s45, 3
      %p352 = por %p350, %p351
      %p353 = scmp.ne.s32.totalorder %s342, %s343
      %p354 = scmp.eq.s32.totalorder %s45, 0
      %p355 = por %p353, %p354
      %p356 = scmp.ne.s32.totalorder %s342, %s343
      %p357 = scmp.eq.s32.totalorder %s46, 3
      %p358 = por %p356, %p357
      %p360 = scmp.ne.s32.totalorder %s343, %s359
      %p361 = scmp.eq.s32.totalorder %s46, 0
      %p362 = por %p360, %p361
      %s363 = ssub.s32 %s48, %s55
      %p364 = scmp.eq.s32.totalorder %s363, 0
      %s366 = sadd.s32 %s365, 1
      %s367 = scalar_select %p364, %s365, %s366
      %p370 = pneg %p364
      %p371 = scmp.eq.s32.totalorder %s40, 3
      %p372 = por %p370, %p371
      %p373 = scmp.ne.s32.totalorder %s365, %s368
      %p374 = scmp.eq.s32.totalorder %s40, 0
      %p375 = por %p373, %p374
      %p376 = scmp.ne.s32.totalorder %s365, %s368
      %p377 = scmp.eq.s32.totalorder %s45, 3
      %p378 = por %p376, %p377
      %p379 = scmp.ne.s32.totalorder %s368, %s369
      %p380 = scmp.eq.s32.totalorder %s45, 0
      %p381 = por %p379, %p380
      %p382 = scmp.ne.s32.totalorder %s368, %s369
      %p383 = scmp.eq.s32.totalorder %s46, 3
      %p384 = por %p382, %p383
      %p386 = scmp.ne.s32.totalorder %s369, %s385
      %p387 = scmp.eq.s32.totalorder %s46, 0
      %p388 = por %p386, %p387
      %s389 = ssub.s32 %s48, %s55
      %p390 = scmp.eq.s32.totalorder %s389, 0
      %s392 = sadd.s32 %s391, 1
      %s393 = scalar_select %p390, %s391, %s392
      %p396 = pneg %p390
      %p397 = scmp.eq.s32.totalorder %s40, 3
      %p398 = por %p396, %p397
      %p399 = scmp.ne.s32.totalorder %s391, %s394
      %p400 = scmp.eq.s32.totalorder %s40, 0
      %p401 = por %p399, %p400
      %p402 = scmp.ne.s32.totalorder %s391, %s394
      %p403 = scmp.eq.s32.totalorder %s45, 3
      %p404 = por %p402, %p403
      %p405 = scmp.ne.s32.totalorder %s394, %s395
      %p406 = scmp.eq.s32.totalorder %s45, 0
      %p407 = por %p405, %p406
      %p408 = scmp.ne.s32.totalorder %s394, %s395
      %p409 = scmp.eq.s32.totalorder %s46, 3
      %p410 = por %p408, %p409
      %p412 = scmp.ne.s32.totalorder %s395, %s411
      %p413 = scmp.eq.s32.totalorder %s46, 0
      %p414 = por %p412, %p413
      %s415 = ssub.s32 %s48, %s55
      %p416 = scmp.eq.s32.totalorder %s415, 0
      %s418 = sadd.s32 %s417, 1
      %s419 = scalar_select %p416, %s417, %s418
      %p422 = pneg %p416
      %p423 = scmp.eq.s32.totalorder %s40, 3
      %p424 = por %p422, %p423
      %p425 = scmp.ne.s32.totalorder %s417, %s420
      %p426 = scmp.eq.s32.totalorder %s40, 0
      %p427 = por %p425, %p426
      %p428 = scmp.ne.s32.totalorder %s417, %s420
      %p429 = scmp.eq.s32.totalorder %s45, 3
      %p430 = por %p428, %p429
      %p431 = scmp.ne.s32.totalorder %s420, %s421
      %p432 = scmp.eq.s32.totalorder %s45, 0
      %p433 = por %p431, %p432
      %p434 = scmp.ne.s32.totalorder %s420, %s421
      %p435 = scmp.eq.s32.totalorder %s46, 3
      %p436 = por %p434, %p435
      %p438 = scmp.ne.s32.totalorder %s421, %s437
      %p439 = scmp.eq.s32.totalorder %s46, 0
      %p440 = por %p438, %p439
      %s441 = ssub.s32 %s48, %s55
      %p442 = scmp.eq.s32.totalorder %s441, 0
      %s444 = sadd.s32 %s443, 1
      %s445 = scalar_select %p442, %s443, %s444
      %p448 = pneg %p442
      %p449 = scmp.eq.s32.totalorder %s40, 3
      %p450 = por %p448, %p449
      %p451 = scmp.ne.s32.totalorder %s443, %s446
      %p452 = scmp.eq.s32.totalorder %s40, 0
      %p453 = por %p451, %p452
      %p454 = scmp.ne.s32.totalorder %s443, %s446
      %p455 = scmp.eq.s32.totalorder %s45, 3
      %p456 = por %p454, %p455
      %p457 = scmp.ne.s32.totalorder %s446, %s447
      %p458 = scmp.eq.s32.totalorder %s45, 0
      %p459 = por %p457, %p458
      %p460 = scmp.ne.s32.totalorder %s446, %s447
      %p461 = scmp.eq.s32.totalorder %s46, 3
      %p462 = por %p460, %p461
      %p464 = scmp.ne.s32.totalorder %s447, %s463
      %p465 = scmp.eq.s32.totalorder %s46, 0
      %p466 = por %p464, %p465
      %s467 = ssub.s32 %s48, %s55
      %p468 = scmp.eq.s32.totalorder %s467, 0
      %s470 = sadd.s32 %s469, 1
      %s471 = scalar_select %p468, %s469, %s470
      %p474 = pneg %p468
      %p475 = scmp.eq.s32.totalorder %s40, 3
      %p476 = por %p474, %p475
      %p477 = scmp.ne.s32.totalorder %s469, %s472
      %p478 = scmp.eq.s32.totalorder %s40, 0
      %p479 = por %p477, %p478
      %p480 = scmp.ne.s32.totalorder %s469, %s472
      %p481 = scmp.eq.s32.totalorder %s45, 3
      %p482 = por %p480, %p481
      %p483 = scmp.ne.s32.totalorder %s472, %s473
      %p484 = scmp.eq.s32.totalorder %s45, 0
      %p485 = por %p483, %p484
      %p486 = scmp.ne.s32.totalorder %s472, %s473
      %p487 = scmp.eq.s32.totalorder %s46, 3
      %p488 = por %p486, %p487
      %p490 = scmp.ne.s32.totalorder %s473, %s489
      %p491 = scmp.eq.s32.totalorder %s46, 0
      %p492 = por %p490, %p491
      %s493 = ssub.s32 %s48, %s55
      %p494 = scmp.eq.s32.totalorder %s493, 0
      %s496 = sadd.s32 %s495, 1
      %s497 = scalar_select %p494, %s495, %s496
      %p500 = pneg %p494
      %p501 = scmp.eq.s32.totalorder %s40, 3
      %p502 = por %p500, %p501
      %p503 = scmp.ne.s32.totalorder %s495, %s498
      %p504 = scmp.eq.s32.totalorder %s40, 0
      %p505 = por %p503, %p504
      %p506 = scmp.ne.s32.totalorder %s495, %s498
      %p507 = scmp.eq.s32.totalorder %s45, 3
      %p508 = por %p506, %p507
      %p509 = scmp.ne.s32.totalorder %s498, %s499
      %p510 = scmp.eq.s32.totalorder %s45, 0
      %p511 = por %p509, %p510
      %p512 = scmp.ne.s32.totalorder %s498, %s499
      %p513 = scmp.eq.s32.totalorder %s46, 3
      %p514 = por %p512, %p513
      %p516 = scmp.ne.s32.totalorder %s499, %s515
      %p517 = scmp.eq.s32.totalorder %s46, 0
      %p518 = por %p516, %p517
      %s519 = ssub.s32 %s48, %s55
      %p520 = scmp.eq.s32.totalorder %s519, 0
      %s522 = sadd.s32 %s521, 1
      %s523 = scalar_select %p520, %s521, %s522
      %p526 = pneg %p520
      %p527 = scmp.eq.s32.totalorder %s40, 3
      %p528 = por %p526, %p527
      %p529 = scmp.ne.s32.totalorder %s521, %s524
      %p530 = scmp.eq.s32.totalorder %s40, 0
      %p531 = por %p529, %p530
      %p532 = scmp.ne.s32.totalorder %s521, %s524
      %p533 = scmp.eq.s32.totalorder %s45, 3
      %p534 = por %p532, %p533
      %p535 = scmp.ne.s32.totalorder %s524, %s525
      %p536 = scmp.eq.s32.totalorder %s45, 0
      %p537 = por %p535, %p536
      %p538 = scmp.ne.s32.totalorder %s524, %s525
      %p539 = scmp.eq.s32.totalorder %s46, 3
      %p540 = por %p538, %p539
      %p542 = scmp.ne.s32.totalorder %s525, %s541
      %p543 = scmp.eq.s32.totalorder %s46, 0
      %p544 = por %p542, %p543
      %s546 = sadd.s32 %s545, 1
      %p549 = scmp.eq.s32.totalorder %s40, 3
      %p550 = scmp.ne.s32.totalorder %s545, %s547
      %p551 = scmp.eq.s32.totalorder %s40, 0
      %p552 = por %p550, %p551
      %p553 = scmp.ne.s32.totalorder %s545, %s547
      %p554 = scmp.eq.s32.totalorder %s45, 3
      %p555 = por %p553, %p554
      %p556 = scmp.ne.s32.totalorder %s547, %s548
      %p557 = scmp.eq.s32.totalorder %s45, 0
      %p558 = por %p556, %p557
      %p559 = scmp.ne.s32.totalorder %s547, %s548
      %p560 = scmp.eq.s32.totalorder %s46, 3
      %p561 = por %p559, %p560
      %p563 = scmp.ne.s32.totalorder %s548, %s562
      %p564 = scmp.eq.s32.totalorder %s46, 0
      %p565 = por %p563, %p564
      %s567 = sadd.s32 %s566, 1
      %p570 = scmp.eq.s32.totalorder %s40, 3
      %p571 = scmp.ne.s32.totalorder %s566, %s568
      %p572 = scmp.eq.s32.totalorder %s40, 0
      %p573 = por %p571, %p572
      %p574 = scmp.ne.s32.totalorder %s566, %s568
      %p575 = scmp.eq.s32.totalorder %s45, 3
      %p576 = por %p574, %p575
      %p577 = scmp.ne.s32.totalorder %s568, %s569
      %p578 = scmp.eq.s32.totalorder %s45, 0
      %p579 = por %p577, %p578
      %p580 = scmp.ne.s32.totalorder %s568, %s569
      %p581 = scmp.eq.s32.totalorder %s46, 3
      %p582 = por %p580, %p581
      %p584 = scmp.ne.s32.totalorder %s569, %s583
      %p585 = scmp.eq.s32.totalorder %s46, 0
      %p586 = por %p584, %p585
      %s587 = ssub.s32 %s47, %s59
      %p588 = scmp.eq.s32.totalorder %s587, 0
      %s590 = sadd.s32 %s589, 1
      %s591 = scalar_select %p588, %s589, %s590
      %p594 = pneg %p588
      %p595 = scmp.eq.s32.totalorder %s40, 3
      %p596 = por %p594, %p595
      %p597 = scmp.ne.s32.totalorder %s589, %s592
      %p598 = scmp.eq.s32.totalorder %s40, 0
      %p599 = por %p597, %p598
      %p600 = scmp.ne.s32.totalorder %s589, %s592
      %p601 = scmp.eq.s32.totalorder %s45, 3
      %p602 = por %p600, %p601
      %p603 = scmp.ne.s32.totalorder %s592, %s593
      %p604 = scmp.eq.s32.totalorder %s45, 0
      %p605 = por %p603, %p604
      %p606 = scmp.ne.s32.totalorder %s592, %s593
      %p607 = scmp.eq.s32.totalorder %s46, 3
      %p608 = por %p606, %p607
      %p610 = scmp.ne.s32.totalorder %s593, %s609
      %p611 = scmp.eq.s32.totalorder %s46, 0
      %p612 = por %p610, %p611
      %p613 = scmp.le.s32.totalorder 1, %s40
      %p614 = scmp.lt.s32.totalorder %s40, 5
      %p615 = pnand %p613, %p614
      %p616 = pneg %p615
      // Predicated region
      $region9: #{tpu_custom_call.1} parent=5 // pred_check
        _
      $region10: #{tpu_custom_call.1} parent=5 // pred_check_branch
        %618 = sbr.rel (%p615) target = $region12
      $region11: #{tpu_custom_call.1} parent=5 // pred_region
        %s619 = ssub.s32 %s40, 1
        // Predicated region
        $region13: #{tpu_custom_call.1} parent=11 // pred_check
          %p620 = pneg %p99
        $region14: #{tpu_custom_call.1} parent=11 // pred_check_branch
          %622 = sbr.rel (%p620) target = $region16
        $region15: #{tpu_custom_call.1} parent=11 // pred_region
          %s624 = ssub.s32 128, 128
          %625 = vsyncadd [#allocation4], %s624
          %s627 = sshll.u32 [#allocation3], 4
          %s628 = int_to_ptr.vmem [resolvable:$true] %s627
          %630 = dma.hbm_to_vmem [thread:$0]  %s1, 128, %s628, [#allocation4]
        $region16: #{tpu_custom_call.1} parent=11 // pred_fallthru
          _
        // Predicated region
        $region17: #{tpu_custom_call.1} parent=11 // pred_check
          %p631 = pneg %p120
        $region18: #{tpu_custom_call.1} parent=11 // pred_check_branch
          %633 = sbr.rel (%p631) target = $region20
        $region19: #{tpu_custom_call.1} parent=11 // pred_region
          %s635 = ssub.s32 32, 32
          %636 = vsyncadd [#allocation7], %s635
          %s638 = sshll.u32 [#allocation6], 4
          %s639 = int_to_ptr.vmem [resolvable:$true] %s638
          %641 = dma.hbm_to_vmem [thread:$0]  %s2, 32, %s639, [#allocation7]
        $region20: #{tpu_custom_call.1} parent=11 // pred_fallthru
          _
        // Predicated region
        $region21: #{tpu_custom_call.1} parent=11 // pred_check
          %p642 = pneg %p141
        $region22: #{tpu_custom_call.1} parent=11 // pred_check_branch
          %644 = sbr.rel (%p642) target = $region24
        $region23: #{tpu_custom_call.1} parent=11 // pred_region
          _
        $region24: #{tpu_custom_call.1} parent=11 // pred_fallthru
          _
        // Predicated region
        $region25: #{tpu_custom_call.1} parent=11 // pred_check
          %p645 = pneg %p162
        $region26: #{tpu_custom_call.1} parent=11 // pred_check_branch
          %647 = sbr.rel (%p645) target = $region28
        $region27: #{tpu_custom_call.1} parent=11 // pred_region
          _
        $region28: #{tpu_custom_call.1} parent=11 // pred_fallthru
          _
        // Predicated region
        $region29: #{tpu_custom_call.1} parent=11 // pred_check
          %p648 = pneg %p183
        $region30: #{tpu_custom_call.1} parent=11 // pred_check_branch
          %650 = sbr.rel (%p648) target = $region32
        $region31: #{tpu_custom_call.1} parent=11 // pred_region
          %s652 = ssub.s32 16, 16
          %653 = vsyncadd [#allocation7], %s652
          %s655 = sshll.u32 [#allocation8], 4
          %s656 = int_to_ptr.vmem [resolvable:$true] %s655
          %658 = dma.hbm_to_vmem [thread:$0]  %s5, 16, %s656, [#allocation7]
        $region32: #{tpu_custom_call.1} parent=11 // pred_fallthru
          _
        // Predicated region
        $region33: #{tpu_custom_call.1} parent=11 // pred_check
          %p659 = pneg %p204
        $region34: #{tpu_custom_call.1} parent=11 // pred_check_branch
          %661 = sbr.rel (%p659) target = $region36
        $region35: #{tpu_custom_call.1} parent=11 // pred_region
          %s663 = ssub.s32 16, 16
          %664 = vsyncadd [#allocation10], %s663
          %s666 = sshll.u32 [#allocation9], 4
          %s667 = int_to_ptr.vmem [resolvable:$true] %s666
          %669 = dma.hbm_to_vmem [thread:$0]  %s6, 16, %s667, [#allocation10]
        $region36: #{tpu_custom_call.1} parent=11 // pred_fallthru
          _
        // Predicated region
        $region37: #{tpu_custom_call.1} parent=11 // pred_check
          %p670 = pneg %p225
        $region38: #{tpu_custom_call.1} parent=11 // pred_check_branch
          %672 = sbr.rel (%p670) target = $region40
        $region39: #{tpu_custom_call.1} parent=11 // pred_region
          %s674 = ssub.s32 16, 16
          %675 = vsyncadd [#allocation10], %s674
          %s677 = sshll.u32 [#allocation11], 4
          %s678 = int_to_ptr.vmem [resolvable:$true] %s677
          %680 = dma.hbm_to_vmem [thread:$0]  %s7, 16, %s678, [#allocation10]
        $region40: #{tpu_custom_call.1} parent=11 // pred_fallthru
          _
        // Predicated region
        $region41: #{tpu_custom_call.1} parent=11 // pred_check
          %p681 = pneg %p558
        $region42: #{tpu_custom_call.1} parent=11 // pred_check_branch
          %683 = sbr.rel (%p681) target = $region44
        $region43: #{tpu_custom_call.1} parent=11 // pred_region
          _
        $region44: #{tpu_custom_call.1} parent=11 // pred_fallthru
          _
        // Predicated region
        $region45: #{tpu_custom_call.1} parent=11 // pred_check
          %p684 = pneg %p579
        $region46: #{tpu_custom_call.1} parent=11 // pred_check_branch
          %686 = sbr.rel (%p684) target = $region48
        $region47: #{tpu_custom_call.1} parent=11 // pred_region
          _
        $region48: #{tpu_custom_call.1} parent=11 // pred_fallthru
          _
      $region12: #{tpu_custom_call.1} parent=5 // pred_fallthru
        _
      %p687 = scmp.lt.s32.totalorder %s40, 4
      // Predicated region
      $region49: #{tpu_custom_call.1} parent=5 // pred_check
        %p688 = pneg %p687
      $region50: #{tpu_custom_call.1} parent=5 // pred_check_branch
        %690 = sbr.rel (%p688) target = $region52
      $region51: #{tpu_custom_call.1} parent=5 // pred_region
        // Predicated region
        $region53: #{tpu_custom_call.1} parent=51 // pred_check
          %p691 = pneg %p72
        $region54: #{tpu_custom_call.1} parent=51 // pred_check_branch
          %693 = sbr.rel (%p691) target = $region56
        $region55: #{tpu_custom_call.1} parent=51 // pred_region
          %p694 = scmp.lt.s32.totalorder %s47, 1
          %s695 = scalar_select %p694, %s47, 1
          %s696 = smul.addr %s695, 8
          %s697 = scalar_lea.vmem %s0, %s696
        $region56: #{tpu_custom_call.1} parent=51 // pred_fallthru
          _
        // Predicated region
        $region57: #{tpu_custom_call.1} parent=51 // pred_check
          %p698 = pneg %p245
        $region58: #{tpu_custom_call.1} parent=51 // pred_check_branch
          %700 = sbr.rel (%p698) target = $region60
        $region59: #{tpu_custom_call.1} parent=51 // pred_region
          %s701 = sand.u32 %s40, 1
          %s702 = scalar_lea.sflag [#allocation13], %s701
          %s703 = sand.u32 %s235, 1
          %s704 = scalar_lea.vmem [#allocation12], %s703
          %s706 = ssub.s32 16, 16
          %707 = vsyncadd %s702, %s706
          %s708 = smul.addr %s48, 16
          %s709 = scalar_lea.hbm %s8, %s708
          %s711 = sshll.u32 %s704, 4
          %s712 = int_to_ptr.vmem [resolvable:$true] %s711
          %714 = dma.hbm_to_vmem [thread:$0]  %s709, 16, %s712, %s702
        $region60: #{tpu_custom_call.1} parent=51 // pred_fallthru
          _
        // Predicated region
        $region61: #{tpu_custom_call.1} parent=51 // pred_check
          %p715 = pneg %p271
        $region62: #{tpu_custom_call.1} parent=51 // pred_check_branch
          %717 = sbr.rel (%p715) target = $region64
        $region63: #{tpu_custom_call.1} parent=51 // pred_region
          %s718 = sand.u32 %s40, 1
          %s719 = scalar_lea.sflag [#allocation13], %s718
          %s720 = sand.u32 %s261, 1
          %s721 = scalar_lea.vmem [#allocation14], %s720
          %s723 = ssub.s32 16, 16
          %724 = vsyncadd %s719, %s723
          %s725 = smul.addr %s48, 16
          %s726 = scalar_lea.hbm %s9, %s725
          %s728 = sshll.u32 %s721, 4
          %s729 = int_to_ptr.vmem [resolvable:$true] %s728
          %731 = dma.hbm_to_vmem [thread:$0]  %s726, 16, %s729, %s719
        $region64: #{tpu_custom_call.1} parent=51 // pred_fallthru
          _
        // Predicated region
        $region65: #{tpu_custom_call.1} parent=51 // pred_check
          %p732 = pneg %p297
        $region66: #{tpu_custom_call.1} parent=51 // pred_check_branch
          %734 = sbr.rel (%p732) target = $region68
        $region67: #{tpu_custom_call.1} parent=51 // pred_region
          %p735 = scmp.lt.s32.totalorder %s48, 1
          %s736 = scalar_select %p735, %s48, 1
          %s737 = smul.addr %s736, 4
          %s738 = smul.addr %s737, 4
          %s739 = scalar_lea.vmem %s10, %s738
        $region68: #{tpu_custom_call.1} parent=51 // pred_fallthru
          _
        // Predicated region
        $region69: #{tpu_custom_call.1} parent=51 // pred_check
          %p740 = pneg %p323
        $region70: #{tpu_custom_call.1} parent=51 // pred_check_branch
          %742 = sbr.rel (%p740) target = $region72
        $region71: #{tpu_custom_call.1} parent=51 // pred_region
          %s743 = sand.u32 %s313, 1
          %s744 = scalar_lea.sflag [#allocation16], %s743
          %s745 = sand.u32 %s313, 1
          %s746 = scalar_lea.vmem [#allocation15], %s745
          %s748 = ssub.s32 16, 16
          %749 = vsyncadd %s744, %s748
          %s750 = smul.addr %s48, 16
          %s751 = scalar_lea.hbm %s11, %s750
          %s753 = sshll.u32 %s746, 4
          %s754 = int_to_ptr.vmem [resolvable:$true] %s753
          %756 = dma.hbm_to_vmem [thread:$0]  %s751, 16, %s754, %s744
        $region72: #{tpu_custom_call.1} parent=51 // pred_fallthru
          _
        // Predicated region
        $region73: #{tpu_custom_call.1} parent=51 // pred_check
          %p757 = pneg %p349
        $region74: #{tpu_custom_call.1} parent=51 // pred_check_branch
          %759 = sbr.rel (%p757) target = $region76
        $region75: #{tpu_custom_call.1} parent=51 // pred_region
          %p760 = scmp.lt.s32.totalorder %s48, 1
          %s761 = scalar_select %p760, %s48, 1
          %s762 = smul.addr %s761, 4
          %s763 = smul.addr %s762, 4
          %s764 = scalar_lea.vmem %s12, %s763
        $region76: #{tpu_custom_call.1} parent=51 // pred_fallthru
          _
        // Predicated region
        $region77: #{tpu_custom_call.1} parent=51 // pred_check
          %p765 = pneg %p375
        $region78: #{tpu_custom_call.1} parent=51 // pred_check_branch
          %767 = sbr.rel (%p765) target = $region80
        $region79: #{tpu_custom_call.1} parent=51 // pred_region
          %p768 = scmp.lt.s32.totalorder %s48, 1
          %s769 = scalar_select %p768, %s48, 1
          %s770 = scalar_lea.vmem %s13, %s769
        $region80: #{tpu_custom_call.1} parent=51 // pred_fallthru
          _
        // Predicated region
        $region81: #{tpu_custom_call.1} parent=51 // pred_check
          %p771 = pneg %p401
        $region82: #{tpu_custom_call.1} parent=51 // pred_check_branch
          %773 = sbr.rel (%p771) target = $region84
        $region83: #{tpu_custom_call.1} parent=51 // pred_region
          %p774 = scmp.lt.s32.totalorder %s48, 1
          %s775 = scalar_select %p774, %s48, 1
          %s776 = scalar_lea.vmem %s14, %s775
        $region84: #{tpu_custom_call.1} parent=51 // pred_fallthru
          _
        // Predicated region
        $region85: #{tpu_custom_call.1} parent=51 // pred_check
          %p777 = pneg %p427
        $region86: #{tpu_custom_call.1} parent=51 // pred_check_branch
          %779 = sbr.rel (%p777) target = $region88
        $region87: #{tpu_custom_call.1} parent=51 // pred_region
          %p780 = scmp.lt.s32.totalorder %s48, 1
          %s781 = scalar_select %p780, %s48, 1
          %s782 = scalar_lea.vmem %s15, %s781
        $region88: #{tpu_custom_call.1} parent=51 // pred_fallthru
          _
        // Predicated region
        $region89: #{tpu_custom_call.1} parent=51 // pred_check
          %p783 = pneg %p453
        $region90: #{tpu_custom_call.1} parent=51 // pred_check_branch
          %785 = sbr.rel (%p783) target = $region92
        $region91: #{tpu_custom_call.1} parent=51 // pred_region
          %p786 = scmp.lt.s32.totalorder %s48, 1
          %s787 = scalar_select %p786, %s48, 1
          %s788 = smul.addr %s787, 4
          %s789 = smul.addr %s788, 4
          %s790 = scalar_lea.vmem %s16, %s789
        $region92: #{tpu_custom_call.1} parent=51 // pred_fallthru
          _
        // Predicated region
        $region93: #{tpu_custom_call.1} parent=51 // pred_check
          %p791 = pneg %p479
        $region94: #{tpu_custom_call.1} parent=51 // pred_check_branch
          %793 = sbr.rel (%p791) target = $region96
        $region95: #{tpu_custom_call.1} parent=51 // pred_region
          %p794 = scmp.lt.s32.totalorder %s48, 1
          %s795 = scalar_select %p794, %s48, 1
          %s796 = scalar_lea.vmem %s17, %s795
        $region96: #{tpu_custom_call.1} parent=51 // pred_fallthru
          _
        // Predicated region
        $region97: #{tpu_custom_call.1} parent=51 // pred_check
          %p797 = pneg %p505
        $region98: #{tpu_custom_call.1} parent=51 // pred_check_branch
          %799 = sbr.rel (%p797) target = $region100
        $region99: #{tpu_custom_call.1} parent=51 // pred_region
          %p800 = scmp.lt.s32.totalorder %s48, 1
          %s801 = scalar_select %p800, %s48, 1
          %s802 = smul.addr %s801, 8
          %s803 = smul.addr %s802, 4
          %s804 = scalar_lea.vmem %s18, %s803
        $region100: #{tpu_custom_call.1} parent=51 // pred_fallthru
          _
        // Predicated region
        $region101: #{tpu_custom_call.1} parent=51 // pred_check
          %p805 = pneg %p531
        $region102: #{tpu_custom_call.1} parent=51 // pred_check_branch
          %807 = sbr.rel (%p805) target = $region104
        $region103: #{tpu_custom_call.1} parent=51 // pred_region
          %p808 = scmp.lt.s32.totalorder %s48, 1
          %s809 = scalar_select %p808, %s48, 1
          %s810 = scalar_lea.vmem %s19, %s809
        $region104: #{tpu_custom_call.1} parent=51 // pred_fallthru
          _
      $region52: #{tpu_custom_call.1} parent=5 // pred_fallthru
        _
      %p811 = scmp.le.s32.totalorder 1, %s40
      %p812 = scmp.lt.s32.totalorder %s40, 5
      %p813 = pnand %p811, %p812
      %p814 = pneg %p813
      // Predicated region
      $region105: #{tpu_custom_call.1} parent=5 // pred_check
        _
      $region106: #{tpu_custom_call.1} parent=5 // pred_check_branch
        %816 = sbr.rel (%p813) target = $region108
      $region107: #{tpu_custom_call.1} parent=5 // pred_region
        %s817 = ssub.s32 %s40, 1
        // Predicated region
        $region109: #{tpu_custom_call.1} parent=107 // pred_check
          %p818 = pneg %p99
        $region110: #{tpu_custom_call.1} parent=107 // pred_check_branch
          %820 = sbr.rel (%p818) target = $region112
        $region111: #{tpu_custom_call.1} parent=107 // pred_region
          %821 = dma.done [#allocation4], 128
        $region112: #{tpu_custom_call.1} parent=107 // pred_fallthru
          _
        // Predicated region
        $region113: #{tpu_custom_call.1} parent=107 // pred_check
          %p822 = pneg %p120
        $region114: #{tpu_custom_call.1} parent=107 // pred_check_branch
          %824 = sbr.rel (%p822) target = $region116
        $region115: #{tpu_custom_call.1} parent=107 // pred_region
          %825 = dma.done [#allocation7], 32
        $region116: #{tpu_custom_call.1} parent=107 // pred_fallthru
          _
        // Predicated region
        $region117: #{tpu_custom_call.1} parent=107 // pred_check
          %p826 = pneg %p183
        $region118: #{tpu_custom_call.1} parent=107 // pred_check_branch
          %828 = sbr.rel (%p826) target = $region120
        $region119: #{tpu_custom_call.1} parent=107 // pred_region
          %829 = dma.done [#allocation7], 16
        $region120: #{tpu_custom_call.1} parent=107 // pred_fallthru
          _
        // Predicated region
        $region121: #{tpu_custom_call.1} parent=107 // pred_check
          %p830 = pneg %p204
        $region122: #{tpu_custom_call.1} parent=107 // pred_check_branch
          %832 = sbr.rel (%p830) target = $region124
        $region123: #{tpu_custom_call.1} parent=107 // pred_region
          %833 = dma.done [#allocation10], 16
        $region124: #{tpu_custom_call.1} parent=107 // pred_fallthru
          _
        // Predicated region
        $region125: #{tpu_custom_call.1} parent=107 // pred_check
          %p834 = pneg %p225
        $region126: #{tpu_custom_call.1} parent=107 // pred_check_branch
          %836 = sbr.rel (%p834) target = $region128
        $region127: #{tpu_custom_call.1} parent=107 // pred_region
          %837 = dma.done [#allocation10], 16
        $region128: #{tpu_custom_call.1} parent=107 // pred_fallthru
          _
        %s838 = sand.u32 %s45, 1
        %s839 = scalar_lea.sflag [#allocation13], %s838
        %s840 = sand.u32 %s238, 1
        %s841 = scalar_lea.vmem [#allocation12], %s840
        // Predicated region
        $region129: #{tpu_custom_call.1} parent=107 // pred_check
          %p842 = pneg %p251
        $region130: #{tpu_custom_call.1} parent=107 // pred_check_branch
          %844 = sbr.rel (%p842) target = $region132
        $region131: #{tpu_custom_call.1} parent=107 // pred_region
          %845 = dma.done %s839, 16
        $region132: #{tpu_custom_call.1} parent=107 // pred_fallthru
          _
        %s846 = sand.u32 %s45, 1
        %s847 = scalar_lea.sflag [#allocation13], %s846
        %s848 = sand.u32 %s264, 1
        %s849 = scalar_lea.vmem [#allocation14], %s848
        // Predicated region
        $region133: #{tpu_custom_call.1} parent=107 // pred_check
          %p850 = pneg %p277
        $region134: #{tpu_custom_call.1} parent=107 // pred_check_branch
          %852 = sbr.rel (%p850) target = $region136
        $region135: #{tpu_custom_call.1} parent=107 // pred_region
          %853 = dma.done %s847, 16
        $region136: #{tpu_custom_call.1} parent=107 // pred_fallthru
          _
        %s854 = sand.u32 %s316, 1
        %s855 = scalar_lea.sflag [#allocation16], %s854
        %s856 = sand.u32 %s316, 1
        %s857 = scalar_lea.vmem [#allocation15], %s856
        // Predicated region
        $region137: #{tpu_custom_call.1} parent=107 // pred_check
          %p858 = pneg %p329
        $region138: #{tpu_custom_call.1} parent=107 // pred_check_branch
          %860 = sbr.rel (%p858) target = $region140
        $region139: #{tpu_custom_call.1} parent=107 // pred_region
          %861 = dma.done %s855, 16
        $region140: #{tpu_custom_call.1} parent=107 // pred_fallthru
          _
        %p862 = scmp.lt.s32.totalorder %s49, 1
        %s863 = scalar_select %p862, %s49, 1
        %s864 = smul.addr %s863, 8
        %s865 = scalar_lea.vmem %s0, %s864
        %p866 = pneg %p78
        %p867 = pneg %p75
        %p868 = pneg %p99
        %p869 = pneg %p96
        %p870 = pneg %p120
        %p871 = pneg %p117
        %p872 = pneg %p141
        %p873 = pneg %p138
        %p874 = pneg %p162
        %p875 = pneg %p159
        %p876 = pneg %p183
        %p877 = pneg %p180
        %p878 = pneg %p204
        %p879 = pneg %p201
        %p880 = pneg %p225
        %p881 = pneg %p222
        %s882 = sand.u32 %s45, 1
        %s883 = scalar_lea.sflag [#allocation13], %s882
        %s884 = sand.u32 %s238, 1
        %s885 = scalar_lea.vmem [#allocation12], %s884
        %p886 = pneg %p251
        %p887 = pneg %p248
        %s888 = sand.u32 %s45, 1
        %s889 = scalar_lea.sflag [#allocation13], %s888
        %s890 = sand.u32 %s264, 1
        %s891 = scalar_lea.vmem [#allocation14], %s890
        %p892 = pneg %p277
        %p893 = pneg %p274
        %p894 = scmp.lt.s32.totalorder %s50, 1
        %s895 = scalar_select %p894, %s50, 1
        %s896 = smul.addr %s895, 4
        %s897 = smul.addr %s896, 4
        %s898 = scalar_lea.vmem %s10, %s897
        %p899 = pneg %p303
        %p900 = pneg %p300
        %s901 = sand.u32 %s316, 1
        %s902 = scalar_lea.sflag [#allocation16], %s901
        %s903 = sand.u32 %s316, 1
        %s904 = scalar_lea.vmem [#allocation15], %s903
        %p905 = pneg %p329
        %p906 = pneg %p326
        %p907 = scmp.lt.s32.totalorder %s50, 1
        %s908 = scalar_select %p907, %s50, 1
        %s909 = smul.addr %s908, 4
        %s910 = smul.addr %s909, 4
        %s911 = scalar_lea.vmem %s12, %s910
        %p912 = pneg %p355
        %p913 = pneg %p352
        %p914 = scmp.lt.s32.totalorder %s50, 1
        %s915 = scalar_select %p914, %s50, 1
        %s916 = scalar_lea.vmem %s13, %s915
        %p917 = pneg %p381
        %p918 = pneg %p378
        %p919 = scmp.lt.s32.totalorder %s50, 1
        %s920 = scalar_select %p919, %s50, 1
        %s921 = scalar_lea.vmem %s14, %s920
        %p922 = pneg %p407
        %p923 = pneg %p404
        %p924 = scmp.lt.s32.totalorder %s50, 1
        %s925 = scalar_select %p924, %s50, 1
        %s926 = scalar_lea.vmem %s15, %s925
        %p927 = pneg %p433
        %p928 = pneg %p430
        %p929 = scmp.lt.s32.totalorder %s50, 1
        %s930 = scalar_select %p929, %s50, 1
        %s931 = smul.addr %s930, 4
        %s932 = smul.addr %s931, 4
        %s933 = scalar_lea.vmem %s16, %s932
        %p934 = pneg %p459
        %p935 = pneg %p456
        %p936 = scmp.lt.s32.totalorder %s50, 1
        %s937 = scalar_select %p936, %s50, 1
        %s938 = scalar_lea.vmem %s17, %s937
        %p939 = pneg %p485
        %p940 = pneg %p482
        %p941 = scmp.lt.s32.totalorder %s50, 1
        %s942 = scalar_select %p941, %s50, 1
        %s943 = smul.addr %s942, 8
        %s944 = smul.addr %s943, 4
        %s945 = scalar_lea.vmem %s18, %s944
        %p946 = pneg %p511
        %p947 = pneg %p508
        %p948 = scmp.lt.s32.totalorder %s50, 1
        %s949 = scalar_select %p948, %s50, 1
        %s950 = scalar_lea.vmem %s19, %s949
        %p951 = pneg %p537
        %p952 = pneg %p534
        %p953 = pneg %p558
        %p954 = pneg %p555
        %p955 = pneg %p579
        %p956 = pneg %p576
        %p957 = pneg %p605
        %p958 = pneg %p602
        %s959 = sand.u32 %s592, 1
        %s960 = scalar_lea.sflag [#allocation5], %s959
        %s961 = sand.u32 %s592, 1
        %s962 = scalar_lea.vmem [#allocation17], %s961
        %p963 = scmp.lt.s32.totalorder %s49, 1
        %s964 = scalar_select %p963, %s49, 1
        %s965 = smul.addr %s964, 8
        %s966 = scalar_lea.vmem %s0, %s965
        %p967 = scmp.lt.s32.totalorder %s50, 1
        %s968 = scalar_select %p967, %s50, 1
        %s969 = smul.addr %s968, 4
        %s970 = smul.addr %s969, 4
        %s971 = scalar_lea.vmem %s10, %s970
        %p972 = scmp.lt.s32.totalorder %s50, 1
        %s973 = scalar_select %p972, %s50, 1
        %s974 = smul.addr %s973, 4
        %s975 = smul.addr %s974, 4
        %s976 = scalar_lea.vmem %s12, %s975
        %p977 = scmp.lt.s32.totalorder %s50, 1
        %s978 = scalar_select %p977, %s50, 1
        %s979 = scalar_lea.vmem %s13, %s978
        %p980 = scmp.lt.s32.totalorder %s50, 1
        %s981 = scalar_select %p980, %s50, 1
        %s982 = scalar_lea.vmem %s14, %s981
        %p983 = scmp.lt.s32.totalorder %s50, 1
        %s984 = scalar_select %p983, %s50, 1
        %s985 = scalar_lea.vmem %s15, %s984
        %p986 = scmp.lt.s32.totalorder %s50, 1
        %s987 = scalar_select %p986, %s50, 1
        %s988 = smul.addr %s987, 4
        %s989 = smul.addr %s988, 4
        %s990 = scalar_lea.vmem %s16, %s989
        %p991 = scmp.lt.s32.totalorder %s50, 1
        %s992 = scalar_select %p991, %s50, 1
        %s993 = scalar_lea.vmem %s17, %s992
        %p994 = scmp.lt.s32.totalorder %s50, 1
        %s995 = scalar_select %p994, %s50, 1
        %s996 = smul.addr %s995, 8
        %s997 = smul.addr %s996, 4
        %s998 = scalar_lea.vmem %s18, %s997
        %p999 = scmp.lt.s32.totalorder %s50, 1
        %s1000 = scalar_select %p999, %s50, 1
        %s1001 = scalar_lea.vmem %s19, %s1000
        %p1003 = scmp.eq.s32.totalorder %s50, 0
        // Predicated region
        $region141: #{tpu_custom_call.1} parent=107 // pred_check
          %p1004 = pneg %p1003
        $region142: #{tpu_custom_call.1} parent=107 // pred_check_branch
          %1006 = sbr.rel (%p1004) target = $region144
        $region143: #{tpu_custom_call.1} parent=107 // pred_region
          %v1007 = vld [vmem:[%s966] sm:$0xff]
          %v1008 = vld [vmem:[#allocation6] sm:$0x3]
          %v1009 = vld [vmem:[%s3] sm:$0x1]
          %v1010 = vpack.c.bf16 %v1007, %v1007
          %v1012 = vlaneseq
          %v1013 = vshrl.u32 %v1012, 7
          %v1014 = vsub.s32 0, %v1013
          %v1015 = vrot.slane %v1009, %v1014
          %vm1017 = vcmask 31744
          %v1019 = vsel %vm1017, %v1010, 0
          %vm1021 = vcmask 1041408
          %v1023 = vsel %vm1021, %v1008, 0
          %1025 = vmatprep.subr.bf16.mxu0 0
          %1026 = vmatpush1.bf16.msra.mxu0 %v1023
          %1027 = vmatprep.subr.bf16.mxu0 0
          %1028 = vmatpush1.bf16.msra.mxu0 0
          %1029 = vmatprep.subr.bf16.mxu0 0
          %1030 = vmatpush1.bf16.msra.mxu0 0
          %1031 = vmatprep.subr.bf16.mxu0 0
          %1032 = vmatpush1.bf16.msra.mxu0 0
          %1033 = vmatprep.subr.bf16.mxu0 0
          %1034 = vmatpush1.bf16.msra.mxu0 0
          %1035 = vmatprep.subr.bf16.mxu0 0
          %1036 = vmatpush1.bf16.msra.mxu0 0
          %1037 = vmatprep.subr.bf16.mxu0 0
          %1038 = vmatpush1.bf16.msra.mxu0 0
          %1039 = vmatprep.subr.bf16.mxu0 0
          %1040 = vmatpush1.bf16.msra.mxu0 0
          %1041 = vmatprep.subr.bf16.mxu0 0
          %1042 = vmatpush1.bf16.msra.mxu0 0
          %1043 = vmatprep.subr.bf16.mxu0 0
          %1044 = vmatpush1.bf16.msra.mxu0 0
          %1045 = vmatprep.subr.bf16.mxu0 0
          %1046 = vmatpush1.bf16.msra.mxu0 0
          %1047 = vmatprep.subr.bf16.mxu0 0
          %1048 = vmatpush1.bf16.msra.mxu0 0
          %1049 = vmatprep.subr.bf16.mxu0 0
          %1050 = vmatpush1.bf16.msra.mxu0 0
          %1051 = vmatprep.subr.bf16.mxu0 0
          %1052 = vmatpush1.bf16.msra.mxu0 0
          %1053 = vmatprep.subr.bf16.mxu0 0
          %1054 = vmatpush1.bf16.msra.mxu0 0
          %1055 = vmatprep.subr.bf16.mxu0 0
          %1056 = vmatpush1.bf16.msra.mxu0 0
          %1057 = vmatprep.mubr.bf16.mxu0 0
          %1058 = vmatmul.mubr.bf16.gmra.mrb[0].mxu0 %v1019
          %v1059 = vpop.f32.mrb[0].mxu0
          %v1060 = vadd.f32 %v1015, %v1059
          %v1061 = vpop.f32.mrb[0].mxu0
          %v1062 = vpop.f32.mrb[0].mxu0
          %v1063 = vpop.f32.mrb[0].mxu0
          %1064 = vdwg.mxu0
          %v1065 = vld [vmem:[%s4] sm:$0xf]
          %v1066 = vld [vmem:[%s4 + $0x4] sm:$0xf]
          %v1067 = vld [vmem:[%s4 + $0x8] sm:$0xf]
          %v1068 = vld [vmem:[%s4 + $0xc] sm:$0xf]
          %v1069 = vld [vmem:[#allocation8] sm:$0x1]
          %v1070 = vpack.c.bf16 %v1060, %v1060
          %v1072 = vlaneseq
          %v1073 = vshrl.u32 %v1072, 7
          %v1074 = vsub.s32 0, %v1073
          %v1075 = vrot.slane %v1069, %v1074
          %v1081 = vunpack.c.l.b16 %v1065
          %v1082 = vunpack.c.l.b16 %v1066
          %v1083 = vunpack.c.l.b16 %v1067
          %v1084 = vunpack.c.l.b16 %v1068
          %v1085 = vpack.c.b16 %v1082, %v1081
          %v1086 = vpack.c.b16 %v1084, %v1083
          %vm1089 = vcmask 261120
          %v1091 = vsel %vm1089, %v1070, 0
          %1093 = vmatprep.subr.bf16.mxu0 0
          %1094 = vmatpush1.bf16.msra.mxu0 %v1085
          %1095 = vmatprep.subr.bf16.mxu0 0
          %1096 = vmatpush1.bf16.msra.mxu0 %v1086
          %1097 = vmatprep.subr.bf16.mxu0 0
          %1098 = vmatpush1.bf16.msra.mxu0 0
          %1099 = vmatprep.subr.bf16.mxu0 0
          %1100 = vmatpush1.bf16.msra.mxu0 0
          %1101 = vmatprep.subr.bf16.mxu0 0
          %1102 = vmatpush1.bf16.msra.mxu0 0
          %1103 = vmatprep.subr.bf16.mxu0 0
          %1104 = vmatpush1.bf16.msra.mxu0 0
          %1105 = vmatprep.subr.bf16.mxu0 0
          %1106 = vmatpush1.bf16.msra.mxu0 0
          %1107 = vmatprep.subr.bf16.mxu0 0
          %1108 = vmatpush1.bf16.msra.mxu0 0
          %1109 = vmatprep.subr.bf16.mxu0 0
          %1110 = vmatpush1.bf16.msra.mxu0 0
          %1111 = vmatprep.subr.bf16.mxu0 0
          %1112 = vmatpush1.bf16.msra.mxu0 0
          %1113 = vmatprep.subr.bf16.mxu0 0
          %1114 = vmatpush1.bf16.msra.mxu0 0
          %1115 = vmatprep.subr.bf16.mxu0 0
          %1116 = vmatpush1.bf16.msra.mxu0 0
          %1117 = vmatprep.subr.bf16.mxu0 0
          %1118 = vmatpush1.bf16.msra.mxu0 0
          %1119 = vmatprep.subr.bf16.mxu0 0
          %1120 = vmatpush1.bf16.msra.mxu0 0
          %1121 = vmatprep.subr.bf16.mxu0 0
          %1122 = vmatpush1.bf16.msra.mxu0 0
          %1123 = vmatprep.subr.bf16.mxu0 0
          %1124 = vmatpush1.bf16.msra.mxu0 0
          %1125 = vmatprep.mubr.bf16.mxu0 0
          %1126 = vmatmul.mubr.bf16.gmra.mrb[0].mxu0 %v1091
          %v1127 = vpop.f32.mrb[0].mxu0
          %v1128 = vadd.f32 %v1075, %v1127
          %v1129 = vpop.f32.mrb[0].mxu0
          %v1130 = vpop.f32.mrb[0].mxu0
          %v1131 = vpop.f32.mrb[0].mxu0
          %1132 = vdwg.mxu0
          %v1133 = vld [vmem:[#allocation3] sm:$0xff]
          %v1134 = vadd.f32 %v1128, %v1133
          %v1135 = vld [vmem:[#allocation9] sm:$0x1]
          %v1136 = vld [vmem:[#allocation11] sm:$0x1]
          %v1137 = vsel %vm1089, %v1134, 0.0
          %1138 = vadd.xlane.f32.xlu0 %v1137
          %v1139 = vpop.xlane.xlu0 %1138
          %v1140 = vrcp.pop 32.0
          %v1141 = vmul.f32 %v1139, %v1140
          %v1142 = vsub.f32 %v1134, %v1141
          %v1143 = vmul.f32 %v1142, %v1142
          %v1144 = vsel %vm1089, %v1143, 0.0
          %1145 = vadd.xlane.f32.xlu0 %v1144
          %v1146 = vpop.xlane.xlu0 %1145
          %v1147 = vmul.f32 %v1146, %v1140
          %v1148 = vadd.f32 %v1147, 1e-12
          %v1149 = vrsqrt.pop %v1148
          %v1150 = vmul.f32 %v1142, %v1149
          %v1152 = vlaneseq
          %v1153 = vshrl.u32 %v1152, 7
          %v1154 = vsub.s32 0, %v1153
          %v1155 = vrot.slane %v1135, %v1154
          %v1157 = vmul.f32 %v1150, %v1155
          %v1159 = vlaneseq
          %v1160 = vshrl.u32 %v1159, 7
          %v1161 = vsub.s32 0, %v1160
          %v1162 = vrot.slane %v1136, %v1161
          %v1164 = vadd.f32 %v1157, %v1162
          %1165 = vst.msk [vmem:[#allocation2] sm:$0xff] %vm1089, %v1164
        $region144: #{tpu_custom_call.1} parent=107 // pred_fallthru
          _
        %v1166 = vld [vmem:[#allocation2] sm:$0xff]
        %v1167 = vld [vmem:[%s841] sm:$0x1]
        %v1168 = vld [vmem:[%s849] sm:$0x1]
        %vm1169 = vcmask 261120
        %v1170 = vsel %vm1169, %v1166, 0.0
        %1171 = vadd.xlane.f32.xlu0 %v1170
        %v1172 = vpop.xlane.xlu0 %1171
        %v1173 = vrcp.pop 32.0
        %v1174 = vmul.f32 %v1172, %v1173
        %v1175 = vsub.f32 %v1166, %v1174
        %v1176 = vmul.f32 %v1175, %v1175
        %v1177 = vsel %vm1169, %v1176, 0.0
        %1178 = vadd.xlane.f32.xlu0 %v1177
        %v1179 = vpop.xlane.xlu0 %1178
        %v1180 = vmul.f32 %v1179, %v1173
        %v1181 = vadd.f32 %v1180, 1e-05
        %v1182 = vrsqrt.pop %v1181
        %v1183 = vmul.f32 %v1175, %v1182
        %v1185 = vlaneseq
        %v1186 = vshrl.u32 %v1185, 7
        %v1187 = vsub.s32 0, %v1186
        %v1188 = vrot.slane %v1167, %v1187
        %v1190 = vmul.f32 %v1183, %v1188
        %v1192 = vlaneseq
        %v1193 = vshrl.u32 %v1192, 7
        %v1194 = vsub.s32 0, %v1193
        %v1195 = vrot.slane %v1168, %v1194
        %v1197 = vadd.f32 %v1190, %v1195
        %v1198 = vld [vmem:[%s971] sm:$0xf]
        %v1199 = vld [vmem:[%s971 + $0x4] sm:$0xf]
        %v1200 = vld [vmem:[%s971 + $0x8] sm:$0xf]
        %v1201 = vld [vmem:[%s971 + $0xc] sm:$0xf]
        %v1202 = vld [vmem:[%s857] sm:$0x1]
        %v1203 = vpack.c.bf16 %v1197, %v1197
        %v1205 = vlaneseq
        %v1206 = vshrl.u32 %v1205, 7
        %v1207 = vsub.s32 0, %v1206
        %v1208 = vrot.slane %v1202, %v1207
        %v1214 = vunpack.c.l.b16 %v1198
        %v1215 = vunpack.c.l.b16 %v1199
        %v1216 = vunpack.c.l.b16 %v1200
        %v1217 = vunpack.c.l.b16 %v1201
        %v1218 = vpack.c.b16 %v1215, %v1214
        %v1219 = vpack.c.b16 %v1217, %v1216
        %v1223 = vsel %vm1169, %v1203, 0
        %1225 = vmatprep.subr.bf16.mxu0 0
        %1226 = vmatpush1.bf16.msra.mxu0 %v1218
        %1227 = vmatprep.subr.bf16.mxu0 0
        %1228 = vmatpush1.bf16.msra.mxu0 %v1219
        %1229 = vmatprep.subr.bf16.mxu0 0
        %1230 = vmatpush1.bf16.msra.mxu0 0
        %1231 = vmatprep.subr.bf16.mxu0 0
        %1232 = vmatpush1.bf16.msra.mxu0 0
        %1233 = vmatprep.subr.bf16.mxu0 0
        %1234 = vmatpush1.bf16.msra.mxu0 0
        %1235 = vmatprep.subr.bf16.mxu0 0
        %1236 = vmatpush1.bf16.msra.mxu0 0
        %1237 = vmatprep.subr.bf16.mxu0 0
        %1238 = vmatpush1.bf16.msra.mxu0 0
        %1239 = vmatprep.subr.bf16.mxu0 0
        %1240 = vmatpush1.bf16.msra.mxu0 0
        %1241 = vmatprep.subr.bf16.mxu0 0
        %1242 = vmatpush1.bf16.msra.mxu0 0
        %1243 = vmatprep.subr.bf16.mxu0 0
        %1244 = vmatpush1.bf16.msra.mxu0 0
        %1245 = vmatprep.subr.bf16.mxu0 0
        %1246 = vmatpush1.bf16.msra.mxu0 0
        %1247 = vmatprep.subr.bf16.mxu0 0
        %1248 = vmatpush1.bf16.msra.mxu0 0
        %1249 = vmatprep.subr.bf16.mxu0 0
        %1250 = vmatpush1.bf16.msra.mxu0 0
        %1251 = vmatprep.subr.bf16.mxu0 0
        %1252 = vmatpush1.bf16.msra.mxu0 0
        %1253 = vmatprep.subr.bf16.mxu0 0
        %1254 = vmatpush1.bf16.msra.mxu0 0
        %1255 = vmatprep.subr.bf16.mxu0 0
        %1256 = vmatpush1.bf16.msra.mxu0 0
        %1257 = vmatprep.mubr.bf16.mxu0 0
        %1258 = vmatmul.mubr.bf16.gmra.mrb[0].mxu0 %v1223
        %v1259 = vpop.f32.mrb[0].mxu0
        %v1260 = vadd.f32 %v1208, %v1259
        %v1261 = vpop.f32.mrb[0].mxu0
        %v1262 = vpop.f32.mrb[0].mxu0
        %v1263 = vpop.f32.mrb[0].mxu0
        %1264 = vdwg.mxu0
        %v1265 = vpack.c.bf16 %v1260, %v1260
        %1267 = vrot.lane.b32.xlu0 %v1265, 96
        %v1268 = vpop.permute.xlu0 %1267
        %vm1269 = vcmask 64512
        %v1271 = vsel %vm1269, %v1265, 0
        %v1274 = vsel %vm1269, %v1268, 0
        %1276 = vmatprep.subr.bf16.mxu0 0
        %1277 = vmatpush1.bf16.xpose.msra.mxu0 %v1274
        %1278 = vmatprep.subr.bf16.mxu0 0
        %1279 = vmatpush1.bf16.xpose.msra.mxu0 0
        %1280 = vmatprep.subr.bf16.mxu0 0
        %1281 = vmatpush1.bf16.xpose.msra.mxu0 0
        %1282 = vmatprep.subr.bf16.mxu0 0
        %1283 = vmatpush1.bf16.xpose.msra.mxu0 0
        %1284 = vmatprep.subr.bf16.mxu0 0
        %1285 = vmatpush1.bf16.xpose.msra.mxu0 0
        %1286 = vmatprep.subr.bf16.mxu0 0
        %1287 = vmatpush1.bf16.xpose.msra.mxu0 0
        %1288 = vmatprep.subr.bf16.mxu0 0
        %1289 = vmatpush1.bf16.xpose.msra.mxu0 0
        %1290 = vmatprep.subr.bf16.mxu0 0
        %1291 = vmatpush1.bf16.xpose.msra.mxu0 0
        %1292 = vmatprep.subr.bf16.mxu0 0
        %1293 = vmatpush1.bf16.xpose.msra.mxu0 0
        %1294 = vmatprep.subr.bf16.mxu0 0
        %1295 = vmatpush1.bf16.xpose.msra.mxu0 0
        %1296 = vmatprep.subr.bf16.mxu0 0
        %1297 = vmatpush1.bf16.xpose.msra.mxu0 0
        %1298 = vmatprep.subr.bf16.mxu0 0
        %1299 = vmatpush1.bf16.xpose.msra.mxu0 0
        %1300 = vmatprep.subr.bf16.mxu0 0
        %1301 = vmatpush1.bf16.xpose.msra.mxu0 0
        %1302 = vmatprep.subr.bf16.mxu0 0
        %1303 = vmatpush1.bf16.xpose.msra.mxu0 0
        %1304 = vmatprep.subr.bf16.mxu0 0
        %1305 = vmatpush1.bf16.xpose.msra.mxu0 0
        %1306 = vmatprep.subr.bf16.mxu0 0
        %1307 = vmatpush1.bf16.xpose.msra.mxu0 0
        %1308 = vmatprep.mubr.bf16.mxu0 0
        %1309 = vmatmul.mubr.bf16.gmra.mrb[0].mxu0 %v1271
        %v1310 = vpop.f32.mrb[0].mxu0
        %v1311 = vadd.f32 0.0, %v1310
        %v1312 = vpop.f32.mrb[0].mxu0
        %v1313 = vpop.f32.mrb[0].mxu0
        %v1314 = vpop.f32.mrb[0].mxu0
        %1315 = vdwg.mxu0
        %v1316 = vsel %vm1269, %v1311, -inf
        %1317 = vmax.xlane.f32.xlu0 %v1316
        %v1318 = vpop.xlane.xlu0 %1317
        %v1319 = vsub.f32 %v1311, %v1318
        %v1320 = vmul.f32 %v1319, 1.442695
        %v1321 = vpow.pop %v1320
        %v1322 = vsel %vm1269, %v1321, 0.0
        %1323 = vadd.xlane.f32.xlu0 %v1322
        %v1324 = vpop.xlane.xlu0 %1323
        %v1325 = vrcp.pop %v1324
        %v1326 = vmul.f32 %v1324, %v1325
        %v1327 = vsub.f32 2.0, %v1326
        %v1328 = vmul.f32 %v1325, %v1327
        %v1329 = vmul.f32 %v1321, %v1328
        %v1330 = vpack.c.bf16 %v1329, %v1329
        %1331 = vrot.lane.b32.xlu0 %v1265, 64
        %v1332 = vpop.permute.xlu0 %1331
        %v1334 = vsel %vm1269, %v1330, 0
        %vm1336 = vcmask 1043456
        %v1338 = vsel %vm1336, %v1332, 0
        %1340 = vmatprep.subr.bf16.mxu0 0
        %1341 = vmatpush1.bf16.msra.mxu0 %v1338
        %1342 = vmatprep.subr.bf16.mxu0 0
        %1343 = vmatpush1.bf16.msra.mxu0 0
        %1344 = vmatprep.subr.bf16.mxu0 0
        %1345 = vmatpush1.bf16.msra.mxu0 0
        %1346 = vmatprep.subr.bf16.mxu0 0
        %1347 = vmatpush1.bf16.msra.mxu0 0
        %1348 = vmatprep.subr.bf16.mxu0 0
        %1349 = vmatpush1.bf16.msra.mxu0 0
        %1350 = vmatprep.subr.bf16.mxu0 0
        %1351 = vmatpush1.bf16.msra.mxu0 0
        %1352 = vmatprep.subr.bf16.mxu0 0
        %1353 = vmatpush1.bf16.msra.mxu0 0
        %1354 = vmatprep.subr.bf16.mxu0 0
        %1355 = vmatpush1.bf16.msra.mxu0 0
        %1356 = vmatprep.subr.bf16.mxu0 0
        %1357 = vmatpush1.bf16.msra.mxu0 0
        %1358 = vmatprep.subr.bf16.mxu0 0
        %1359 = vmatpush1.bf16.msra.mxu0 0
        %1360 = vmatprep.subr.bf16.mxu0 0
        %1361 = vmatpush1.bf16.msra.mxu0 0
        %1362 = vmatprep.subr.bf16.mxu0 0
        %1363 = vmatpush1.bf16.msra.mxu0 0
        %1364 = vmatprep.subr.bf16.mxu0 0
        %1365 = vmatpush1.bf16.msra.mxu0 0
        %1366 = vmatprep.subr.bf16.mxu0 0
        %1367 = vmatpush1.bf16.msra.mxu0 0
        %1368 = vmatprep.subr.bf16.mxu0 0
        %1369 = vmatpush1.bf16.msra.mxu0 0
        %1370 = vmatprep.subr.bf16.mxu0 0
        %1371 = vmatpush1.bf16.msra.mxu0 0
        %1372 = vmatprep.mubr.bf16.mxu0 0
        %1373 = vmatmul.mubr.bf16.gmra.mrb[0].mxu0 %v1334
        %v1374 = vpop.f32.mrb[0].mxu0
        %v1375 = vadd.f32 0.0, %v1374
        %v1376 = vpop.f32.mrb[0].mxu0
        %v1377 = vpop.f32.mrb[0].mxu0
        %v1378 = vpop.f32.mrb[0].mxu0
        %1379 = vdwg.mxu0
        %1380 = vrot.lane.b32.xlu0 %v1265, 120
        %v1381 = vpop.permute.xlu0 %1380
        %1382 = vrot.lane.b32.xlu0 %v1265, 88
        %v1383 = vpop.permute.xlu0 %1382
        %v1385 = vsel %vm1269, %v1381, 0
        %v1388 = vsel %vm1269, %v1383, 0
        %1390 = vmatprep.subr.bf16.mxu0 0
        %1391 = vmatpush1.bf16.xpose.msra.mxu0 %v1388
        %1392 = vmatprep.subr.bf16.mxu0 0
        %1393 = vmatpush1.bf16.xpose.msra.mxu0 0
        %1394 = vmatprep.subr.bf16.mxu0 0
        %1395 = vmatpush1.bf16.xpose.msra.mxu0 0
        %1396 = vmatprep.subr.bf16.mxu0 0
        %1397 = vmatpush1.bf16.xpose.msra.mxu0 0
        %1398 = vmatprep.subr.bf16.mxu0 0
        %1399 = vmatpush1.bf16.xpose.msra.mxu0 0
        %1400 = vmatprep.subr.bf16.mxu0 0
        %1401 = vmatpush1.bf16.xpose.msra.mxu0 0
        %1402 = vmatprep.subr.bf16.mxu0 0
        %1403 = vmatpush1.bf16.xpose.msra.mxu0 0
        %1404 = vmatprep.subr.bf16.mxu0 0
        %1405 = vmatpush1.bf16.xpose.msra.mxu0 0
        %1406 = vmatprep.subr.bf16.mxu0 0
        %1407 = vmatpush1.bf16.xpose.msra.mxu0 0
        %1408 = vmatprep.subr.bf16.mxu0 0
        %1409 = vmatpush1.bf16.xpose.msra.mxu0 0
        %1410 = vmatprep.subr.bf16.mxu0 0
        %1411 = vmatpush1.bf16.xpose.msra.mxu0 0
        %1412 = vmatprep.subr.bf16.mxu0 0
        %1413 = vmatpush1.bf16.xpose.msra.mxu0 0
        %1414 = vmatprep.subr.bf16.mxu0 0
        %1415 = vmatpush1.bf16.xpose.msra.mxu0 0
        %1416 = vmatprep.subr.bf16.mxu0 0
        %1417 = vmatpush1.bf16.xpose.msra.mxu0 0
        %1418 = vmatprep.subr.bf16.mxu0 0
        %1419 = vmatpush1.bf16.xpose.msra.mxu0 0
        %1420 = vmatprep.subr.bf16.mxu0 0
        %1421 = vmatpush1.bf16.xpose.msra.mxu0 0
        %1422 = vmatprep.mubr.bf16.mxu0 0
        %1423 = vmatmul.mubr.bf16.gmra.mrb[0].mxu0 %v1385
        %v1424 = vpop.f32.mrb[0].mxu0
        %v1425 = vadd.f32 0.0, %v1424
        %v1426 = vpop.f32.mrb[0].mxu0
        %v1427 = vpop.f32.mrb[0].mxu0
        %v1428 = vpop.f32.mrb[0].mxu0
        %1429 = vdwg.mxu0
        %v1430 = vsel %vm1269, %v1425, -inf
        %1431 = vmax.xlane.f32.xlu0 %v1430
        %v1432 = vpop.xlane.xlu0 %1431
        %v1433 = vsub.f32 %v1425, %v1432
        %v1434 = vmul.f32 %v1433, 1.442695
        %v1435 = vpow.pop %v1434
        %v1436 = vsel %vm1269, %v1435, 0.0
        %1437 = vadd.xlane.f32.xlu0 %v1436
        %v1438 = vpop.xlane.xlu0 %1437
        %v1439 = vrcp.pop %v1438
        %v1440 = vmul.f32 %v1438, %v1439
        %v1441 = vsub.f32 2.0, %v1440
        %v1442 = vmul.f32 %v1439, %v1441
        %v1443 = vmul.f32 %v1435, %v1442
        %v1444 = vpack.c.bf16 %v1443, %v1443
        %1445 = vrot.lane.b32.xlu0 %v1265, 56
        %v1446 = vpop.permute.xlu0 %1445
        %v1448 = vsel %vm1269, %v1444, 0
        %v1451 = vsel %vm1336, %v1446, 0
        %1453 = vmatprep.subr.bf16.mxu0 0
        %1454 = vmatpush1.bf16.msra.mxu0 %v1451
        %1455 = vmatprep.subr.bf16.mxu0 0
        %1456 = vmatpush1.bf16.msra.mxu0 0
        %1457 = vmatprep.subr.bf16.mxu0 0
        %1458 = vmatpush1.bf16.msra.mxu0 0
        %1459 = vmatprep.subr.bf16.mxu0 0
        %1460 = vmatpush1.bf16.msra.mxu0 0
        %1461 = vmatprep.subr.bf16.mxu0 0
        %1462 = vmatpush1.bf16.msra.mxu0 0
        %1463 = vmatprep.subr.bf16.mxu0 0
        %1464 = vmatpush1.bf16.msra.mxu0 0
        %1465 = vmatprep.subr.bf16.mxu0 0
        %1466 = vmatpush1.bf16.msra.mxu0 0
        %1467 = vmatprep.subr.bf16.mxu0 0
        %1468 = vmatpush1.bf16.msra.mxu0 0
        %1469 = vmatprep.subr.bf16.mxu0 0
        %1470 = vmatpush1.bf16.msra.mxu0 0
        %1471 = vmatprep.subr.bf16.mxu0 0
        %1472 = vmatpush1.bf16.msra.mxu0 0
        %1473 = vmatprep.subr.bf16.mxu0 0
        %1474 = vmatpush1.bf16.msra.mxu0 0
        %1475 = vmatprep.subr.bf16.mxu0 0
        %1476 = vmatpush1.bf16.msra.mxu0 0
        %1477 = vmatprep.subr.bf16.mxu0 0
        %1478 = vmatpush1.bf16.msra.mxu0 0
        %1479 = vmatprep.subr.bf16.mxu0 0
        %1480 = vmatpush1.bf16.msra.mxu0 0
        %1481 = vmatprep.subr.bf16.mxu0 0
        %1482 = vmatpush1.bf16.msra.mxu0 0
        %1483 = vmatprep.subr.bf16.mxu0 0
        %1484 = vmatpush1.bf16.msra.mxu0 0
        %1485 = vmatprep.mubr.bf16.mxu0 0
        %1486 = vmatmul.mubr.bf16.gmra.mrb[0].mxu0 %v1448
        %v1487 = vpop.f32.mrb[0].mxu0
        %v1488 = vadd.f32 0.0, %v1487
        %v1489 = vpop.f32.mrb[0].mxu0
        %v1490 = vpop.f32.mrb[0].mxu0
        %v1491 = vpop.f32.mrb[0].mxu0
        %1492 = vdwg.mxu0
        %1493 = vrot.lane.b32.xlu0 %v1265, 112
        %v1494 = vpop.permute.xlu0 %1493
        %1495 = vrot.lane.b32.xlu0 %v1265, 80
        %v1496 = vpop.permute.xlu0 %1495
        %v1498 = vsel %vm1269, %v1494, 0
        %v1501 = vsel %vm1269, %v1496, 0
        %1503 = vmatprep.subr.bf16.mxu0 0
        %1504 = vmatpush1.bf16.xpose.msra.mxu0 %v1501
        %1505 = vmatprep.subr.bf16.mxu0 0
        %1506 = vmatpush1.bf16.xpose.msra.mxu0 0
        %1507 = vmatprep.subr.bf16.mxu0 0
        %1508 = vmatpush1.bf16.xpose.msra.mxu0 0
        %1509 = vmatprep.subr.bf16.mxu0 0
        %1510 = vmatpush1.bf16.xpose.msra.mxu0 0
        %1511 = vmatprep.subr.bf16.mxu0 0
        %1512 = vmatpush1.bf16.xpose.msra.mxu0 0
        %1513 = vmatprep.subr.bf16.mxu0 0
        %1514 = vmatpush1.bf16.xpose.msra.mxu0 0
        %1515 = vmatprep.subr.bf16.mxu0 0
        %1516 = vmatpush1.bf16.xpose.msra.mxu0 0
        %1517 = vmatprep.subr.bf16.mxu0 0
        %1518 = vmatpush1.bf16.xpose.msra.mxu0 0
        %1519 = vmatprep.subr.bf16.mxu0 0
        %1520 = vmatpush1.bf16.xpose.msra.mxu0 0
        %1521 = vmatprep.subr.bf16.mxu0 0
        %1522 = vmatpush1.bf16.xpose.msra.mxu0 0
        %1523 = vmatprep.subr.bf16.mxu0 0
        %1524 = vmatpush1.bf16.xpose.msra.mxu0 0
        %1525 = vmatprep.subr.bf16.mxu0 0
        %1526 = vmatpush1.bf16.xpose.msra.mxu0 0
        %1527 = vmatprep.subr.bf16.mxu0 0
        %1528 = vmatpush1.bf16.xpose.msra.mxu0 0
        %1529 = vmatprep.subr.bf16.mxu0 0
        %1530 = vmatpush1.bf16.xpose.msra.mxu0 0
        %1531 = vmatprep.subr.bf16.mxu0 0
        %1532 = vmatpush1.bf16.xpose.msra.mxu0 0
        %1533 = vmatprep.subr.bf16.mxu0 0
        %1534 = vmatpush1.bf16.xpose.msra.mxu0 0
        %1535 = vmatprep.mubr.bf16.mxu0 0
        %1536 = vmatmul.mubr.bf16.gmra.mrb[0].mxu0 %v1498
        %v1537 = vpop.f32.mrb[0].mxu0
        %v1538 = vadd.f32 0.0, %v1537
        %v1539 = vpop.f32.mrb[0].mxu0
        %v1540 = vpop.f32.mrb[0].mxu0
        %v1541 = vpop.f32.mrb[0].mxu0
        %1542 = vdwg.mxu0
        %v1543 = vsel %vm1269, %v1538, -inf
        %1544 = vmax.xlane.f32.xlu0 %v1543
        %v1545 = vpop.xlane.xlu0 %1544
        %v1546 = vsub.f32 %v1538, %v1545
        %v1547 = vmul.f32 %v1546, 1.442695
        %v1548 = vpow.pop %v1547
        %v1549 = vsel %vm1269, %v1548, 0.0
        %1550 = vadd.xlane.f32.xlu0 %v1549
        %v1551 = vpop.xlane.xlu0 %1550
        %v1552 = vrcp.pop %v1551
        %v1553 = vmul.f32 %v1551, %v1552
        %v1554 = vsub.f32 2.0, %v1553
        %v1555 = vmul.f32 %v1552, %v1554
        %v1556 = vmul.f32 %v1548, %v1555
        %v1557 = vpack.c.bf16 %v1556, %v1556
        %1558 = vrot.lane.b32.xlu0 %v1265, 48
        %v1559 = vpop.permute.xlu0 %1558
        %v1561 = vsel %vm1269, %v1557, 0
        %v1564 = vsel %vm1336, %v1559, 0
        %1566 = vmatprep.subr.bf16.mxu0 0
        %1567 = vmatpush1.bf16.msra.mxu0 %v1564
        %1568 = vmatprep.subr.bf16.mxu0 0
        %1569 = vmatpush1.bf16.msra.mxu0 0
        %1570 = vmatprep.subr.bf16.mxu0 0
        %1571 = vmatpush1.bf16.msra.mxu0 0
        %1572 = vmatprep.subr.bf16.mxu0 0
        %1573 = vmatpush1.bf16.msra.mxu0 0
        %1574 = vmatprep.subr.bf16.mxu0 0
        %1575 = vmatpush1.bf16.msra.mxu0 0
        %1576 = vmatprep.subr.bf16.mxu0 0
        %1577 = vmatpush1.bf16.msra.mxu0 0
        %1578 = vmatprep.subr.bf16.mxu0 0
        %1579 = vmatpush1.bf16.msra.mxu0 0
        %1580 = vmatprep.subr.bf16.mxu0 0
        %1581 = vmatpush1.bf16.msra.mxu0 0
        %1582 = vmatprep.subr.bf16.mxu0 0
        %1583 = vmatpush1.bf16.msra.mxu0 0
        %1584 = vmatprep.subr.bf16.mxu0 0
        %1585 = vmatpush1.bf16.msra.mxu0 0
        %1586 = vmatprep.subr.bf16.mxu0 0
        %1587 = vmatpush1.bf16.msra.mxu0 0
        %1588 = vmatprep.subr.bf16.mxu0 0
        %1589 = vmatpush1.bf16.msra.mxu0 0
        %1590 = vmatprep.subr.bf16.mxu0 0
        %1591 = vmatpush1.bf16.msra.mxu0 0
        %1592 = vmatprep.subr.bf16.mxu0 0
        %1593 = vmatpush1.bf16.msra.mxu0 0
        %1594 = vmatprep.subr.bf16.mxu0 0
        %1595 = vmatpush1.bf16.msra.mxu0 0
        %1596 = vmatprep.subr.bf16.mxu0 0
        %1597 = vmatpush1.bf16.msra.mxu0 0
        %1598 = vmatprep.mubr.bf16.mxu0 0
        %1599 = vmatmul.mubr.bf16.gmra.mrb[0].mxu0 %v1561
        %v1600 = vpop.f32.mrb[0].mxu0
        %v1601 = vadd.f32 0.0, %v1600
        %v1602 = vpop.f32.mrb[0].mxu0
        %v1603 = vpop.f32.mrb[0].mxu0
        %v1604 = vpop.f32.mrb[0].mxu0
        %1605 = vdwg.mxu0
        %1606 = vrot.lane.b32.xlu0 %v1265, 104
        %v1607 = vpop.permute.xlu0 %1606
        %1608 = vrot.lane.b32.xlu0 %v1265, 72
        %v1609 = vpop.permute.xlu0 %1608
        %v1611 = vsel %vm1269, %v1607, 0
        %v1614 = vsel %vm1269, %v1609, 0
        %1616 = vmatprep.subr.bf16.mxu0 0
        %1617 = vmatpush1.bf16.xpose.msra.mxu0 %v1614
        %1618 = vmatprep.subr.bf16.mxu0 0
        %1619 = vmatpush1.bf16.xpose.msra.mxu0 0
        %1620 = vmatprep.subr.bf16.mxu0 0
        %1621 = vmatpush1.bf16.xpose.msra.mxu0 0
        %1622 = vmatprep.subr.bf16.mxu0 0
        %1623 = vmatpush1.bf16.xpose.msra.mxu0 0
        %1624 = vmatprep.subr.bf16.mxu0 0
        %1625 = vmatpush1.bf16.xpose.msra.mxu0 0
        %1626 = vmatprep.subr.bf16.mxu0 0
        %1627 = vmatpush1.bf16.xpose.msra.mxu0 0
        %1628 = vmatprep.subr.bf16.mxu0 0
        %1629 = vmatpush1.bf16.xpose.msra.mxu0 0
        %1630 = vmatprep.subr.bf16.mxu0 0
        %1631 = vmatpush1.bf16.xpose.msra.mxu0 0
        %1632 = vmatprep.subr.bf16.mxu0 0
        %1633 = vmatpush1.bf16.xpose.msra.mxu0 0
        %1634 = vmatprep.subr.bf16.mxu0 0
        %1635 = vmatpush1.bf16.xpose.msra.mxu0 0
        %1636 = vmatprep.subr.bf16.mxu0 0
        %1637 = vmatpush1.bf16.xpose.msra.mxu0 0
        %1638 = vmatprep.subr.bf16.mxu0 0
        %1639 = vmatpush1.bf16.xpose.msra.mxu0 0
        %1640 = vmatprep.subr.bf16.mxu0 0
        %1641 = vmatpush1.bf16.xpose.msra.mxu0 0
        %1642 = vmatprep.subr.bf16.mxu0 0
        %1643 = vmatpush1.bf16.xpose.msra.mxu0 0
        %1644 = vmatprep.subr.bf16.mxu0 0
        %1645 = vmatpush1.bf16.xpose.msra.mxu0 0
        %1646 = vmatprep.subr.bf16.mxu0 0
        %1647 = vmatpush1.bf16.xpose.msra.mxu0 0
        %1648 = vmatprep.mubr.bf16.mxu0 0
        %1649 = vmatmul.mubr.bf16.gmra.mrb[0].mxu0 %v1611
        %v1650 = vpop.f32.mrb[0].mxu0
        %v1651 = vadd.f32 0.0, %v1650
        %v1652 = vpop.f32.mrb[0].mxu0
        %v1653 = vpop.f32.mrb[0].mxu0
        %v1654 = vpop.f32.mrb[0].mxu0
        %1655 = vdwg.mxu0
        %v1656 = vsel %vm1269, %v1651, -inf
        %1657 = vmax.xlane.f32.xlu0 %v1656
        %v1658 = vpop.xlane.xlu0 %1657
        %v1659 = vsub.f32 %v1651, %v1658
        %v1660 = vmul.f32 %v1659, 1.442695
        %v1661 = vpow.pop %v1660
        %v1662 = vsel %vm1269, %v1661, 0.0
        %1663 = vadd.xlane.f32.xlu0 %v1662
        %v1664 = vpop.xlane.xlu0 %1663
        %v1665 = vrcp.pop %v1664
        %v1666 = vmul.f32 %v1664, %v1665
        %v1667 = vsub.f32 2.0, %v1666
        %v1668 = vmul.f32 %v1665, %v1667
        %v1669 = vmul.f32 %v1661, %v1668
        %v1670 = vpack.c.bf16 %v1669, %v1669
        %1671 = vrot.lane.b32.xlu0 %v1265, 40
        %v1672 = vpop.permute.xlu0 %1671
        %v1674 = vsel %vm1269, %v1670, 0
        %v1677 = vsel %vm1336, %v1672, 0
        %1679 = vmatprep.subr.bf16.mxu0 0
        %1680 = vmatpush1.bf16.msra.mxu0 %v1677
        %1681 = vmatprep.subr.bf16.mxu0 0
        %1682 = vmatpush1.bf16.msra.mxu0 0
        %1683 = vmatprep.subr.bf16.mxu0 0
        %1684 = vmatpush1.bf16.msra.mxu0 0
        %1685 = vmatprep.subr.bf16.mxu0 0
        %1686 = vmatpush1.bf16.msra.mxu0 0
        %1687 = vmatprep.subr.bf16.mxu0 0
        %1688 = vmatpush1.bf16.msra.mxu0 0
        %1689 = vmatprep.subr.bf16.mxu0 0
        %1690 = vmatpush1.bf16.msra.mxu0 0
        %1691 = vmatprep.subr.bf16.mxu0 0
        %1692 = vmatpush1.bf16.msra.mxu0 0
        %1693 = vmatprep.subr.bf16.mxu0 0
        %1694 = vmatpush1.bf16.msra.mxu0 0
        %1695 = vmatprep.subr.bf16.mxu0 0
        %1696 = vmatpush1.bf16.msra.mxu0 0
        %1697 = vmatprep.subr.bf16.mxu0 0
        %1698 = vmatpush1.bf16.msra.mxu0 0
        %1699 = vmatprep.subr.bf16.mxu0 0
        %1700 = vmatpush1.bf16.msra.mxu0 0
        %1701 = vmatprep.subr.bf16.mxu0 0
        %1702 = vmatpush1.bf16.msra.mxu0 0
        %1703 = vmatprep.subr.bf16.mxu0 0
        %1704 = vmatpush1.bf16.msra.mxu0 0
        %1705 = vmatprep.subr.bf16.mxu0 0
        %1706 = vmatpush1.bf16.msra.mxu0 0
        %1707 = vmatprep.subr.bf16.mxu0 0
        %1708 = vmatpush1.bf16.msra.mxu0 0
        %1709 = vmatprep.subr.bf16.mxu0 0
        %1710 = vmatpush1.bf16.msra.mxu0 0
        %1711 = vmatprep.mubr.bf16.mxu0 0
        %1712 = vmatmul.mubr.bf16.gmra.mrb[0].mxu0 %v1674
        %v1713 = vpop.f32.mrb[0].mxu0
        %v1714 = vadd.f32 0.0, %v1713
        %v1715 = vpop.f32.mrb[0].mxu0
        %v1716 = vpop.f32.mrb[0].mxu0
        %v1717 = vpop.f32.mrb[0].mxu0
        %1718 = vdwg.mxu0
        %1720 = vrot.lane.b32.xlu0 %v1488, 8
        %v1721 = vpop.permute.xlu0 %1720
        %1724 = vrot.lane.b32.xlu0 %v1601, 16
        %v1725 = vpop.permute.xlu0 %1724
        %1728 = vrot.lane.b32.xlu0 %v1714, 24
        %v1729 = vpop.permute.xlu0 %1728
        %v1731 = vsel %vm1269, %v1375, %v1721
        %vm1732 = vcmask 130048
        %v1733 = vsel %vm1732, %v1731, %v1725
        %vm1734 = vcmask 195584
        %v1735 = vsel %vm1734, %v1733, %v1729
        %v1736 = vld [vmem:[%s976] sm:$0xf]
        %v1737 = vld [vmem:[%s976 + $0x4] sm:$0xf]
        %v1738 = vld [vmem:[%s976 + $0x8] sm:$0xf]
        %v1739 = vld [vmem:[%s976 + $0xc] sm:$0xf]
        %v1740 = vld [vmem:[%s979] sm:$0x1]
        %v1741 = vpack.c.bf16 %v1735, %v1735
        %v1743 = vlaneseq
        %v1744 = vshrl.u32 %v1743, 7
        %v1745 = vsub.s32 0, %v1744
        %v1746 = vrot.slane %v1740, %v1745
        %v1752 = vunpack.c.l.b16 %v1736
        %v1753 = vunpack.c.l.b16 %v1737
        %v1754 = vunpack.c.l.b16 %v1738
        %v1755 = vunpack.c.l.b16 %v1739
        %v1756 = vpack.c.b16 %v1753, %v1752
        %v1757 = vpack.c.b16 %v1755, %v1754
        %v1761 = vsel %vm1169, %v1741, 0
        %1763 = vmatprep.subr.bf16.mxu0 0
        %1764 = vmatpush1.bf16.msra.mxu0 %v1756
        %1765 = vmatprep.subr.bf16.mxu0 0
        %1766 = vmatpush1.bf16.msra.mxu0 %v1757
        %1767 = vmatprep.subr.bf16.mxu0 0
        %1768 = vmatpush1.bf16.msra.mxu0 0
        %1769 = vmatprep.subr.bf16.mxu0 0
        %1770 = vmatpush1.bf16.msra.mxu0 0
        %1771 = vmatprep.subr.bf16.mxu0 0
        %1772 = vmatpush1.bf16.msra.mxu0 0
        %1773 = vmatprep.subr.bf16.mxu0 0
        %1774 = vmatpush1.bf16.msra.mxu0 0
        %1775 = vmatprep.subr.bf16.mxu0 0
        %1776 = vmatpush1.bf16.msra.mxu0 0
        %1777 = vmatprep.subr.bf16.mxu0 0
        %1778 = vmatpush1.bf16.msra.mxu0 0
        %1779 = vmatprep.subr.bf16.mxu0 0
        %1780 = vmatpush1.bf16.msra.mxu0 0
        %1781 = vmatprep.subr.bf16.mxu0 0
        %1782 = vmatpush1.bf16.msra.mxu0 0
        %1783 = vmatprep.subr.bf16.mxu0 0
        %1784 = vmatpush1.bf16.msra.mxu0 0
        %1785 = vmatprep.subr.bf16.mxu0 0
        %1786 = vmatpush1.bf16.msra.mxu0 0
        %1787 = vmatprep.subr.bf16.mxu0 0
        %1788 = vmatpush1.bf16.msra.mxu0 0
        %1789 = vmatprep.subr.bf16.mxu0 0
        %1790 = vmatpush1.bf16.msra.mxu0 0
        %1791 = vmatprep.subr.bf16.mxu0 0
        %1792 = vmatpush1.bf16.msra.mxu0 0
        %1793 = vmatprep.subr.bf16.mxu0 0
        %1794 = vmatpush1.bf16.msra.mxu0 0
        %1795 = vmatprep.mubr.bf16.mxu0 0
        %1796 = vmatmul.mubr.bf16.gmra.mrb[0].mxu0 %v1761
        %v1797 = vpop.f32.mrb[0].mxu0
        %v1798 = vadd.f32 %v1746, %v1797
        %v1799 = vpop.f32.mrb[0].mxu0
        %v1800 = vpop.f32.mrb[0].mxu0
        %v1801 = vpop.f32.mrb[0].mxu0
        %1802 = vdwg.mxu0
        %v1803 = vadd.f32 %v1166, %v1798
        %v1804 = vld [vmem:[%s982] sm:$0x1]
        %v1805 = vld [vmem:[%s985] sm:$0x1]
        %v1806 = vsel %vm1169, %v1803, 0.0
        %1807 = vadd.xlane.f32.xlu0 %v1806
        %v1808 = vpop.xlane.xlu0 %1807
        %v1809 = vmul.f32 %v1808, %v1173
        %v1810 = vsub.f32 %v1803, %v1809
        %v1811 = vmul.f32 %v1810, %v1810
        %v1812 = vsel %vm1169, %v1811, 0.0
        %1813 = vadd.xlane.f32.xlu0 %v1812
        %v1814 = vpop.xlane.xlu0 %1813
        %v1815 = vmul.f32 %v1814, %v1173
        %v1816 = vadd.f32 %v1815, 1e-05
        %v1817 = vrsqrt.pop %v1816
        %v1818 = vmul.f32 %v1810, %v1817
        %v1820 = vlaneseq
        %v1821 = vshrl.u32 %v1820, 7
        %v1822 = vsub.s32 0, %v1821
        %v1823 = vrot.slane %v1804, %v1822
        %v1825 = vmul.f32 %v1818, %v1823
        %v1827 = vlaneseq
        %v1828 = vshrl.u32 %v1827, 7
        %v1829 = vsub.s32 0, %v1828
        %v1830 = vrot.slane %v1805, %v1829
        %v1832 = vadd.f32 %v1825, %v1830
        %v1833 = vld [vmem:[%s990] sm:$0xf]
        %v1834 = vld [vmem:[%s990 + $0x4] sm:$0xf]
        %v1835 = vld [vmem:[%s990 + $0x8] sm:$0xf]
        %v1836 = vld [vmem:[%s990 + $0xc] sm:$0xf]
        %v1837 = vld [vmem:[%s993] sm:$0x1]
        %v1838 = vpack.c.bf16 %v1832, %v1832
        %v1840 = vlaneseq
        %v1841 = vshrl.u32 %v1840, 7
        %v1842 = vsub.s32 0, %v1841
        %v1843 = vrot.slane %v1837, %v1842
        %v1849 = vunpack.c.l.b16 %v1833
        %v1850 = vunpack.c.l.b16 %v1834
        %v1851 = vunpack.c.l.b16 %v1835
        %v1852 = vunpack.c.l.b16 %v1836
        %v1853 = vpack.c.b16 %v1850, %v1849
        %v1854 = vpack.c.b16 %v1852, %v1851
        %v1858 = vsel %vm1169, %v1838, 0
        %1860 = vmatprep.subr.bf16.mxu0 0
        %1861 = vmatpush1.bf16.msra.mxu0 %v1853
        %1862 = vmatprep.subr.bf16.mxu0 0
        %1863 = vmatpush1.bf16.msra.mxu0 %v1854
        %1864 = vmatprep.subr.bf16.mxu0 0
        %1865 = vmatpush1.bf16.msra.mxu0 0
        %1866 = vmatprep.subr.bf16.mxu0 0
        %1867 = vmatpush1.bf16.msra.mxu0 0
        %1868 = vmatprep.subr.bf16.mxu0 0
        %1869 = vmatpush1.bf16.msra.mxu0 0
        %1870 = vmatprep.subr.bf16.mxu0 0
        %1871 = vmatpush1.bf16.msra.mxu0 0
        %1872 = vmatprep.subr.bf16.mxu0 0
        %1873 = vmatpush1.bf16.msra.mxu0 0
        %1874 = vmatprep.subr.bf16.mxu0 0
        %1875 = vmatpush1.bf16.msra.mxu0 0
        %1876 = vmatprep.subr.bf16.mxu0 0
        %1877 = vmatpush1.bf16.msra.mxu0 0
        %1878 = vmatprep.subr.bf16.mxu0 0
        %1879 = vmatpush1.bf16.msra.mxu0 0
        %1880 = vmatprep.subr.bf16.mxu0 0
        %1881 = vmatpush1.bf16.msra.mxu0 0
        %1882 = vmatprep.subr.bf16.mxu0 0
        %1883 = vmatpush1.bf16.msra.mxu0 0
        %1884 = vmatprep.subr.bf16.mxu0 0
        %1885 = vmatpush1.bf16.msra.mxu0 0
        %1886 = vmatprep.subr.bf16.mxu0 0
        %1887 = vmatpush1.bf16.msra.mxu0 0
        %1888 = vmatprep.subr.bf16.mxu0 0
        %1889 = vmatpush1.bf16.msra.mxu0 0
        %1890 = vmatprep.subr.bf16.mxu0 0
        %1891 = vmatpush1.bf16.msra.mxu0 0
        %1892 = vmatprep.mubr.bf16.mxu0 0
        %1893 = vmatmul.mubr.bf16.gmra.mrb[0].mxu0 %v1858
        %v1894 = vpop.f32.mrb[0].mxu0
        %v1895 = vadd.f32 %v1843, %v1894
        %v1896 = vpop.f32.mrb[0].mxu0
        %v1897 = vpop.f32.mrb[0].mxu0
        %v1898 = vpop.f32.mrb[0].mxu0
        %1899 = vdwg.mxu0
        %v1900 = vmul.f32 %v1895, 0.5
        %v1901 = vmul.f32 %v1895, 0.70710677
        %v1902 = vand.u32 2147483647, %v1901
        %v1903 = vmul.f32 %v1902, 0.3275911
        %v1904 = vadd.f32 %v1903, 1.0
        %v1905 = vrcp.pop %v1904
        %v1906 = vmul.f32 %v1904, %v1905
        %v1907 = vsub.f32 2.0, %v1906
        %v1908 = vmul.f32 %v1905, %v1907
        %v1909 = vmul.f32 %v1908, 1.0614054
        %v1910 = vadd.f32 %v1909, -1.4531521
        %v1911 = vmul.f32 %v1910, %v1908
        %v1912 = vadd.f32 %v1911, 1.4214138
        %v1913 = vmul.f32 %v1912, %v1908
        %v1914 = vadd.f32 %v1913, -0.28449672
        %v1915 = vmul.f32 %v1914, %v1908
        %v1916 = vadd.f32 %v1915, 0.2548296
        %v1917 = vmul.f32 %v1916, %v1908
        %v1918 = vsub.f32 0.0, %v1902
        %v1919 = vmul.f32 %v1918, %v1902
        %v1920 = vmul.f32 %v1919, 1.442695
        %v1921 = vpow.pop %v1920
        %v1922 = vmul.f32 %v1917, %v1921
        %v1923 = vsub.f32 1.0, %v1922
        %vm1924 = vcmp.lt.f32.partialorder %v1901, 0.0
        %v1925 = vsub.f32 0.0, %v1923
        %v1926 = vsel %vm1924, %v1925, %v1923
        %v1927 = vadd.f32 %v1926, 1.0
        %v1928 = vmul.f32 %v1900, %v1927
        %v1929 = vld [vmem:[%s998] sm:$0xf]
        %v1930 = vld [vmem:[%s998 + $0x4] sm:$0xf]
        %v1931 = vld [vmem:[%s998 + $0x8] sm:$0xf]
        %v1932 = vld [vmem:[%s998 + $0xc] sm:$0xf]
        %v1933 = vld [vmem:[%s998 + $0x10] sm:$0xf]
        %v1934 = vld [vmem:[%s998 + $0x14] sm:$0xf]
        %v1935 = vld [vmem:[%s998 + $0x18] sm:$0xf]
        %v1936 = vld [vmem:[%s998 + $0x1c] sm:$0xf]
        %v1937 = vld [vmem:[%s1001] sm:$0x1]
        %v1938 = vpack.c.bf16 %v1928, %v1928
        %v1940 = vlaneseq
        %v1941 = vshrl.u32 %v1940, 7
        %v1942 = vsub.s32 0, %v1941
        %v1943 = vrot.slane %v1937, %v1942
        %v1953 = vunpack.c.l.b16 %v1929
        %v1954 = vunpack.c.l.b16 %v1930
        %v1955 = vunpack.c.l.b16 %v1931
        %v1956 = vunpack.c.l.b16 %v1932
        %v1957 = vunpack.c.l.b16 %v1933
        %v1958 = vunpack.c.l.b16 %v1934
        %v1959 = vunpack.c.l.b16 %v1935
        %v1960 = vunpack.c.l.b16 %v1936
        %v1961 = vpack.c.b16 %v1954, %v1953
        %v1962 = vpack.c.b16 %v1956, %v1955
        %v1963 = vpack.c.b16 %v1958, %v1957
        %v1964 = vpack.c.b16 %v1960, %v1959
        %vm1969 = vcmask 523264
        %v1971 = vsel %vm1969, %v1938, 0
        %1973 = vmatprep.subr.bf16.mxu0 0
        %1974 = vmatpush1.bf16.msra.mxu0 %v1961
        %1975 = vmatprep.subr.bf16.mxu0 0
        %1976 = vmatpush1.bf16.msra.mxu0 %v1962
        %1977 = vmatprep.subr.bf16.mxu0 0
        %1978 = vmatpush1.bf16.msra.mxu0 %v1963
        %1979 = vmatprep.subr.bf16.mxu0 0
        %1980 = vmatpush1.bf16.msra.mxu0 %v1964
        %1981 = vmatprep.subr.bf16.mxu0 0
        %1982 = vmatpush1.bf16.msra.mxu0 0
        %1983 = vmatprep.subr.bf16.mxu0 0
        %1984 = vmatpush1.bf16.msra.mxu0 0
        %1985 = vmatprep.subr.bf16.mxu0 0
        %1986 = vmatpush1.bf16.msra.mxu0 0
        %1987 = vmatprep.subr.bf16.mxu0 0
        %1988 = vmatpush1.bf16.msra.mxu0 0
        %1989 = vmatprep.subr.bf16.mxu0 0
        %1990 = vmatpush1.bf16.msra.mxu0 0
        %1991 = vmatprep.subr.bf16.mxu0 0
        %1992 = vmatpush1.bf16.msra.mxu0 0
        %1993 = vmatprep.subr.bf16.mxu0 0
        %1994 = vmatpush1.bf16.msra.mxu0 0
        %1995 = vmatprep.subr.bf16.mxu0 0
        %1996 = vmatpush1.bf16.msra.mxu0 0
        %1997 = vmatprep.subr.bf16.mxu0 0
        %1998 = vmatpush1.bf16.msra.mxu0 0
        %1999 = vmatprep.subr.bf16.mxu0 0
        %2000 = vmatpush1.bf16.msra.mxu0 0
        %2001 = vmatprep.subr.bf16.mxu0 0
        %2002 = vmatpush1.bf16.msra.mxu0 0
        %2003 = vmatprep.subr.bf16.mxu0 0
        %2004 = vmatpush1.bf16.msra.mxu0 0
        %2005 = vmatprep.mubr.bf16.mxu0 0
        %2006 = vmatmul.mubr.bf16.gmra.mrb[0].mxu0 %v1971
        %v2007 = vpop.f32.mrb[0].mxu0
        %v2008 = vadd.f32 %v1943, %v2007
        %v2009 = vpop.f32.mrb[0].mxu0
        %v2010 = vpop.f32.mrb[0].mxu0
        %v2011 = vpop.f32.mrb[0].mxu0
        %2012 = vdwg.mxu0
        %v2013 = vadd.f32 %v1803, %v2008
        %2014 = vst.msk [vmem:[#allocation2] sm:$0xff] %vm1169, %v2013
        %p2015 = scmp.eq.s32.totalorder %s50, 1
        // Predicated region
        $region145: #{tpu_custom_call.1} parent=107 // pred_check
          %p2016 = pneg %p2015
        $region146: #{tpu_custom_call.1} parent=107 // pred_check_branch
          %2018 = sbr.rel (%p2016) target = $region148
        $region147: #{tpu_custom_call.1} parent=107 // pred_region
          %v2019 = vld [vmem:[%s20] sm:$0xf]
          %v2020 = vld [vmem:[%s20 + $0x4] sm:$0xf]
          %v2021 = vld [vmem:[%s20 + $0x8] sm:$0xf]
          %v2022 = vld [vmem:[%s20 + $0xc] sm:$0xf]
          %v2023 = vld [vmem:[%s21] sm:$0x1]
          %v2024 = vpack.c.bf16 %v2013, %v2013
          %v2029 = vunpack.c.l.b16 %v2019
          %v2030 = vunpack.c.l.b16 %v2020
          %v2031 = vunpack.c.l.b16 %v2021
          %v2032 = vunpack.c.l.b16 %v2022
          %v2033 = vpack.c.b16 %v2030, %v2029
          %v2034 = vpack.c.b16 %v2032, %v2031
          %v2038 = vsel %vm1169, %v2024, 0
          %2040 = vmatprep.subr.bf16.mxu0 0
          %2041 = vmatpush1.bf16.msra.mxu0 %v2033
          %2042 = vmatprep.subr.bf16.mxu0 0
          %2043 = vmatpush1.bf16.msra.mxu0 %v2034
          %2044 = vmatprep.subr.bf16.mxu0 0
          %2045 = vmatpush1.bf16.msra.mxu0 0
          %2046 = vmatprep.subr.bf16.mxu0 0
          %2047 = vmatpush1.bf16.msra.mxu0 0
          %2048 = vmatprep.subr.bf16.mxu0 0
          %2049 = vmatpush1.bf16.msra.mxu0 0
          %2050 = vmatprep.subr.bf16.mxu0 0
          %2051 = vmatpush1.bf16.msra.mxu0 0
          %2052 = vmatprep.subr.bf16.mxu0 0
          %2053 = vmatpush1.bf16.msra.mxu0 0
          %2054 = vmatprep.subr.bf16.mxu0 0
          %2055 = vmatpush1.bf16.msra.mxu0 0
          %2056 = vmatprep.subr.bf16.mxu0 0
          %2057 = vmatpush1.bf16.msra.mxu0 0
          %2058 = vmatprep.subr.bf16.mxu0 0
          %2059 = vmatpush1.bf16.msra.mxu0 0
          %2060 = vmatprep.subr.bf16.mxu0 0
          %2061 = vmatpush1.bf16.msra.mxu0 0
          %2062 = vmatprep.subr.bf16.mxu0 0
          %2063 = vmatpush1.bf16.msra.mxu0 0
          %2064 = vmatprep.subr.bf16.mxu0 0
          %2065 = vmatpush1.bf16.msra.mxu0 0
          %2066 = vmatprep.subr.bf16.mxu0 0
          %2067 = vmatpush1.bf16.msra.mxu0 0
          %2068 = vmatprep.subr.bf16.mxu0 0
          %2069 = vmatpush1.bf16.msra.mxu0 0
          %2070 = vmatprep.subr.bf16.mxu0 0
          %2071 = vmatpush1.bf16.msra.mxu0 0
          %2072 = vmatprep.mubr.bf16.mxu0 0
          %2073 = vmatmul.mubr.bf16.gmra.mrb[0].mxu0 %v2038
          %v2074 = vpop.f32.mrb[0].mxu0
          %v2075 = vadd.f32 %v2023, %v2074
          %v2076 = vpop.f32.mrb[0].mxu0
          %v2077 = vpop.f32.mrb[0].mxu0
          %v2078 = vpop.f32.mrb[0].mxu0
          %2079 = vdwg.mxu0
          %2080 = vst [vmem:[%s962] sm:$0x1] %v2075
        $region148: #{tpu_custom_call.1} parent=107 // pred_fallthru
          _
        %s2081 = sand.u32 %s592, 1
        %s2082 = scalar_lea.sflag [#allocation5], %s2081
        %s2083 = sand.u32 %s592, 1
        %s2084 = scalar_lea.vmem [#allocation17], %s2083
        // Predicated region
        $region149: #{tpu_custom_call.1} parent=107 // pred_check
          %p2085 = pneg %p602
        $region150: #{tpu_custom_call.1} parent=107 // pred_check_branch
          %2087 = sbr.rel (%p2085) target = $region152
        $region151: #{tpu_custom_call.1} parent=107 // pred_region
          %s2089 = ssub.s32 16, 16
          %2090 = vsyncadd %s2082, %s2089
          %s2091 = smul.addr %s49, 16
          %s2092 = scalar_lea.hbm %s22, %s2091
          %s2094 = sshll.u32 %s2084, 4
          %s2095 = int_to_ptr.vmem [resolvable:$true] %s2094
          %2097 = dma.vmem_to_hbm [thread:$0]  %s2095, 16, %s2092, %s2082
        $region152: #{tpu_custom_call.1} parent=107 // pred_fallthru
          _
      $region108: #{tpu_custom_call.1} parent=5 // pred_fallthru
        _
      %p2098 = scmp.le.s32.totalorder 2, %s40
      // Predicated region
      $region153: #{tpu_custom_call.1} parent=5 // pred_check
        %p2099 = pneg %p2098
      $region154: #{tpu_custom_call.1} parent=5 // pred_check_branch
        %2101 = sbr.rel (%p2099) target = $region156
      $region155: #{tpu_custom_call.1} parent=5 // pred_region
        %s2102 = ssub.s32 %s40, 2
        // Predicated region
        $region157: #{tpu_custom_call.1} parent=155 // pred_check
          %p2103 = pneg %p608
        $region158: #{tpu_custom_call.1} parent=155 // pred_check_branch
          %2105 = sbr.rel (%p2103) target = $region160
        $region159: #{tpu_custom_call.1} parent=155 // pred_region
          %s2106 = sand.u32 %s593, 1
          %s2107 = scalar_lea.sflag [#allocation5], %s2106
          %s2108 = sand.u32 %s593, 1
          %s2109 = scalar_lea.vmem [#allocation17], %s2108
          %2110 = dma.done %s2107, 16
        $region160: #{tpu_custom_call.1} parent=155 // pred_fallthru
          _
      $region156: #{tpu_custom_call.1} parent=5 // pred_fallthru
        _
    $region6: #{tpu_custom_call.1} parent=1 // loop_footer
      %s44 = sadd.s32 1, %s40
    $region7: #{tpu_custom_call.1} parent=1 // loop_footer_branch
      %39 = sbr.rel target = $region3
    $region8: #{tpu_custom_call.1} parent=1 // loop_exit
      _
    %2111 = vsyncpa [#allocation4], 1
    %s2112 = scalar_lea.sflag [#allocation4], 1
    %2113 = vsyncpa %s2112, 1
    %2114 = vsyncpa [#allocation7], 1
    %2115 = vsyncpa [#allocation10], 1
    %2116 = vsyncpa [#allocation13], 1
    %s2117 = scalar_lea.sflag [#allocation13], 1
    %2118 = vsyncpa %s2117, 1
    %2119 = vsyncpa [#allocation16], 1
    %s2120 = scalar_lea.sflag [#allocation16], 1
    %2121 = vsyncpa %s2120, 1
    %2122 = vsyncpa [#allocation5], 1
    %s2123 = scalar_lea.sflag [#allocation5], 1
    %2124 = vsyncpa %s2123, 1

</llo_original>
